<compile_context>
chip_gen: v6e
topology: v6e:2x2x1
jax: 0.10.0
libtpu: 0.0.40
codegen_flags: <defaults>
</compile_context>

<pallas_src>
import jax
import jax.numpy as jnp
from jax.experimental import pallas as pl
from jax.experimental.pallas import tpu as pltpu

BN_EPS = 1e-5          # nn.BatchNorm2d default eps
L1_EPS = 1e-12         # F.normalize default eps
LEAKY_SLOPE = 0.01     # nn.LeakyReLU() default negative_slope


def _round_up(x, m):
    return (x + m - 1) // m * m


def _pack_params(w0, bn0, w1, bn1):
    """Pack (W0 (2F,C1), bn0 (2,C1), W1 (C1,C2), bn1 (2,C2)) into one f32 blob.

    Rows of each block are padded to a multiple of 8 (sublane alignment) and all
    blocks share one lane width, so the kernel can take static, tile-aligned
    slices.  Returns (blob, (off_w0, off_bn0, off_w1, off_bn1))."""
    two_f, c1 = w0.shape
    c2 = w1.shape[1]
    width = max(c1, c2)
    r_w0 = _round_up(two_f, 8)
    r_bn = 8
    r_w1 = _round_up(c1, 8)

    def pad(a, rows):
        return jnp.pad(a, ((0, rows - a.shape[0]), (0, width - a.shape[1])))

    blob = jnp.concatenate(
        [pad(w0, r_w0), pad(bn0, r_bn), pad(w1, r_w1), pad(bn1, r_bn)], axis=0
    ).astype(jnp.float32)
    off_w0 = 0
    off_bn0 = r_w0
    off_w1 = r_w0 + r_bn
    off_bn1 = r_w0 + r_bn + r_w1
    return blob, (off_w0, off_bn0, off_w1, off_bn1)


def _make_nodenet_kernel(two_f, c1, c2, off_bn0, off_w1, off_bn1):
    def kernel(node_ref, edge_ref, pblob_ref, out_ref):
        node = node_ref[...]                       # (GB, N, F)  f32
        edge = edge_ref[...]                       # (GB, N, N)  f32
        gb, n, _ = node.shape

        # ---- zero the diagonal + L1 row-normalize (F.normalize p=1, dim=-1) --
        row = jax.lax.broadcasted_iota(jnp.int32, (gb, n, n), 1)
        col = jax.lax.broadcasted_iota(jnp.int32, (gb, n, n), 2)
        e = jnp.where(row == col, 0.0, edge)
        l1 = jnp.sum(jnp.abs(e), axis=-1, keepdims=True)          # (GB, N, 1)
        e = e / jnp.maximum(l1, L1_EPS)                            # exact divide

        # ---- aggregation: per-graph (N,N) @ (N,F) ----------------------------
        aggr = jnp.einsum("gij,gjf->gif", e, node,
                          preferred_element_type=jnp.float32)      # (GB, N, F)

        # ---- conv0: single shared-weight 2-D matmul --------------------------
        x = jnp.concatenate([node, aggr], axis=-1)                 # (GB, N, 2F)
        x2d = x.reshape(gb * n, two_f)
        w0 = pblob_ref[0:two_f, 0:c1]                              # (2F, C1)
        h = jnp.dot(x2d, w0, preferred_element_type=jnp.float32)   # (GB*N, C1)
        h = h.reshape(gb, n, c1)

        # ---- BatchNorm0 (train mode, per-graph stats, biased two-pass var) ---
        g0 = pblob_ref[off_bn0:off_bn0 + 1, 0:c1]                  # (1, C1)
        b0 = pblob_ref[off_bn0 + 1:off_bn0 + 2, 0:c1]              # (1, C1)
        mean0 = jnp.mean(h, axis=1, keepdims=True)                 # (GB, 1, C1)
        var0 = jnp.mean((h - mean0) ** 2, axis=1, keepdims=True)
        scale0 = g0 * jax.lax.rsqrt(var0 + BN_EPS)
        shift0 = b0 - mean0 * scale0
        h = h * scale0 + shift0

        # ---- LeakyReLU --------------------------------------------------------
        h = jnp.where(h >= 0.0, h, LEAKY_SLOPE * h)

        # ---- conv1 (single 2-D matmul) + BatchNorm1 (no activation after) ----
        w1 = pblob_ref[off_w1:off_w1 + c1, 0:c2]                   # (C1, C2)
        h2 = jnp.dot(h.reshape(gb * n, c1), w1,
                     preferred_element_type=jnp.float32)           # (GB*N, C2)
        h2 = h2.reshape(gb, n, c2)
        g1 = pblob_ref[off_bn1:off_bn1 + 1, 0:c2]
        b1 = pblob_ref[off_bn1 + 1:off_bn1 + 2, 0:c2]
        mean1 = jnp.mean(h2, axis=1, keepdims=True)
        var1 = jnp.mean((h2 - mean1) ** 2, axis=1, keepdims=True)
        scale1 = g1 * jax.lax.rsqrt(var1 + BN_EPS)
        shift1 = b1 - mean1 * scale1
        out_ref[...] = h2 * scale1 + shift1

    return kernel


def _num_tensorcores():
    """1 on single-TC chips (v5e/v6e); 2 on v7x-class chips (2 TCs/chip)."""
    try:
        kind = jax.devices()[0].device_kind.lower()
    except Exception:
        return 1
    return 2 if "v7" in kind else 1


def nodenet_forward_batched(node_feat, edge_feat, params, *, graphs_per_block=None):
    """Batched NodeNet forward.

    node_feat: (B, N, F) f32, edge_feat: (B, N, N) f32 (extra singleton dims OK).
    Returns (B, N, C2).  Each graph is processed with per-graph BN statistics,
    exactly matching B independent calls of NodeNet.forward.

    graphs_per_block=None picks a chip-aware chunking: the whole batch in one grid
    step on single-TC chips, two chunks on 2-TC chips.
    """
    b, n, f = node_feat.shape
    edge3 = edge_feat.reshape(b, n, n)
    w0, bn0, w1, bn1 = params
    two_f, c1 = w0.shape
    c2 = w1.shape[1]

    if graphs_per_block is None:
        chunks = _num_tensorcores()
        gb = max(1, pl.cdiv(b, chunks))
    else:
        gb = max(1, min(graphs_per_block, b))

    # Pad the batch up to a multiple of the chunk size (padded graphs produce
    # finite garbage that is discarded; per-graph work is fully independent).
    b_pad = pl.cdiv(b, gb) * gb
    if b_pad != b:
        node_feat = jnp.pad(node_feat, ((0, b_pad - b), (0, 0), (0, 0)))
        edge3 = jnp.pad(edge3, ((0, b_pad - b), (0, 0), (0, 0)))
    grid = (b_pad // gb,)

    blob, (_, off_bn0, off_w1, off_bn1) = _pack_params(w0, bn0, w1, bn1)
    kernel = _make_nodenet_kernel(two_f, c1, c2, off_bn0, off_w1, off_bn1)

    # NOTE(v7x): if N grows, re-budget gb against the O(N^2) edge block
    # (2 x gb x N^2 x 4 B double-buffered) and set vmem_limit_bytes explicitly;
    # at these shapes the whole working set is a few tens of KB, so no limit needed.
    out = pl.pallas_call(
        kernel,
        out_shape=jax.ShapeDtypeStruct((b_pad, n, c2), jnp.float32),
        grid_spec=pltpu.PrefetchScalarGridSpec(
            num_scalar_prefetch=0,
            grid=grid,
            in_specs=[
                pl.BlockSpec((gb, n, f), lambda i: (i, 0, 0)),   # node chunk
                pl.BlockSpec((gb, n, n), lambda i: (i, 0, 0)),   # edge chunk
                pl.BlockSpec(blob.shape, lambda i: (0, 0)),      # packed params
            ],
            out_specs=pl.BlockSpec((gb, n, c2), lambda i: (i, 0, 0)),
        ),
        compiler_params=pltpu.CompilerParams(
            dimension_semantics=("parallel",),   # shard batch chunks across TCs
        ),
    )(node_feat, edge3, blob)
    return out[:b]


def nodenet_forward(node_feat, edge_feat, params):
    """Single-graph forward matching NodeNet.forward's signature:
    node_feat (N, F), edge_feat (1, 1, N, N) -> (N, C2)."""
    n, _ = node_feat.shape
    out = nodenet_forward_batched(node_feat[None], edge_feat.reshape(1, n, n),
                                  params, graphs_per_block=1)
    return out[0]


def init_params(key, in_features, num_features, ratio=(2, 1)):
    """Deterministic synthetic parameters matching NodeNet.__init__ shapes:
    (W0 (2F,C1), bn0 (2,C1), W1 (C1,C2), bn1 (2,C2))."""
    num_features_list = [num_features * r for r in ratio]
    c1, c2 = num_features_list[0], num_features_list[1]
    k0, k1, k2, k3, k4, k5 = jax.random.split(key, 6)
    # Conv2d(in_features*2 -> c1, k=1, bias=False): weight (c1, 2F, 1, 1) -> (2F, c1)
    w0 = jax.random.normal(k0, (in_features * 2, c1), jnp.float32) * 0.1
    g0 = 1.0 + 0.05 * jax.random.normal(k1, (c1,), jnp.float32)
    b0 = 0.05 * jax.random.normal(k2, (c1,), jnp.float32)
    bn0 = jnp.stack([g0, b0], axis=0)                  # (2, C1): row0=gamma, row1=beta
    # Conv2d(c1 -> c2, k=1, bias=False): weight (c2, c1, 1, 1) -> (c1, c2)
    w1 = jax.random.normal(k3, (c1, c2), jnp.float32) * 0.1
    g1 = 1.0 + 0.05 * jax.random.normal(k4, (c2,), jnp.float32)
    b1 = 0.05 * jax.random.normal(k5, (c2,), jnp.float32)
    bn1 = jnp.stack([g1, b1], axis=0)                  # (2, C2)
    return (w0, bn0, w1, bn1)


def _reference_forward(node_feat, edge_feat, params):
    """Pure-JAX replica of NodeNet.forward for one graph (correctness check)."""
    w0, bn0, w1, bn1 = params
    n = node_feat.shape[0]
    mask = 1.0 - jnp.eye(n, dtype=node_feat.dtype)
    e = edge_feat * mask
    l1 = jnp.sum(jnp.abs(e), axis=-1, keepdims=True)
    e = e / jnp.maximum(l1, L1_EPS)
    aggr = e @ node_feat
    x = jnp.concatenate([node_feat, aggr], axis=-1)
    h = x @ w0
    mean0 = jnp.mean(h, axis=0, keepdims=True)
    var0 = jnp.mean((h - mean0) ** 2, axis=0, keepdims=True)
    h = (h - mean0) / jnp.sqrt(var0 + BN_EPS) * bn0[0] + bn0[1]
    h = jnp.where(h >= 0.0, h, LEAKY_SLOPE * h)
    h2 = h @ w1
    mean1 = jnp.mean(h2, axis=0, keepdims=True)
    var1 = jnp.mean((h2 - mean1) ** 2, axis=0, keepdims=True)
    return (h2 - mean1) / jnp.sqrt(var1 + BN_EPS) * bn1[0] + bn1[1]


if __name__ == "__main__":
    B = 8              # number of graphs batched into one pallas_call
    N = 8              # number of graph nodes (num_data)
    IN_FEATURES = 16   # in_features
    NUM_FEATURES = 32  # num_features -> hidden channels [64, 32]

    key = jax.random.PRNGKey(0)
    k_node, k_edge, k_param = jax.random.split(key, 3)

    node_feat = jax.random.normal(k_node, (B, N, IN_FEATURES), jnp.float32)
    edge_feat = jax.random.uniform(k_edge, (B, N, N), jnp.float32)
    params = init_params(k_param, IN_FEATURES, NUM_FEATURES)

    out = nodenet_forward_batched(node_feat, edge_feat, params)
    out = jax.block_until_ready(out)
    assert out.shape == (B, N, NUM_FEATURES), out.shape

    # Correctness check against the pure-JAX per-graph reference
    # (tolerance covers MXU vs XLA matmul rounding; the L1 divide is now exact).
    ref = jnp.stack([_reference_forward(node_feat[i], edge_feat[i], params)
                     for i in range(B)])
    max_err = float(jnp.max(jnp.abs(out - ref)))
    assert bool(jnp.all(jnp.isfinite(out))) and max_err < 1e-2, max_err

    print("KERNEL_OK")
</pallas_src>

<mosaic_0001>
module attributes {stable_mosaic.version = 11 : i64} {
  func.func @kernel(%arg0: i32, %arg1: memref<8x8x16xf32, #tpu.memory_space<vmem>>, %arg2: memref<8x8x8xf32, #tpu.memory_space<vmem>>, %arg3: memref<112x64xf32, #tpu.memory_space<vmem>>, %arg4: memref<8x8x32xf32, #tpu.memory_space<vmem>>) attributes {dimension_semantics = [#tpu.dimension_semantics<parallel>], iteration_bounds = array<i64: 1>, scalar_prefetch = 0 : i64, scratch_operands = 0 : i64, tpu.core_type = #tpu.core_type<tc>, window_params = [{transform_indices = @transform_0, window_bounds = array<i64: 8, 8, 16>}, {transform_indices = @transform_1, window_bounds = array<i64: 8, 8, 8>}, {pipeline_mode = #tpu.pipeline_mode<synchronous>, transform_indices = @transform_2, window_bounds = array<i64: 112, 64>}, {transform_indices = @transform_3, window_bounds = array<i64: 8, 8, 32>}]} {
    %c0 = arith.constant 0 : index
    %c0_0 = arith.constant 0 : index
    %c0_1 = arith.constant 0 : index
    %0 = vector.load %arg1[%c0, %c0_0, %c0_1] : memref<8x8x16xf32, #tpu.memory_space<vmem>>, vector<8x8x16xf32>
    %c0_2 = arith.constant 0 : index
    %c0_3 = arith.constant 0 : index
    %c0_4 = arith.constant 0 : index
    %1 = vector.load %arg2[%c0_2, %c0_3, %c0_4] : memref<8x8x8xf32, #tpu.memory_space<vmem>>, vector<8x8x8xf32>
    %2 = tpu.iota {dimensions = array<i32: 1>} : vector<8x8x8xi32>
    %3 = tpu.iota {dimensions = array<i32: 2>} : vector<8x8x8xi32>
    %4 = arith.cmpi eq, %2, %3 : vector<8x8x8xi32>
    %cst = arith.constant 0.000000e+00 : f32
    %5 = vector.broadcast %cst : f32 to vector<8x8x8xf32>
    %6 = arith.select %4, %5, %1 : vector<8x8x8xi1>, vector<8x8x8xf32>
    %7 = math.absf %6 : vector<8x8x8xf32>
    %cst_5 = arith.constant dense<0.000000e+00> : vector<8x8xf32>
    %8 = vector.multi_reduction <add>, %7, %cst_5 [2] : vector<8x8x8xf32> to vector<8x8xf32>
    %9 = vector.shape_cast %8 : vector<8x8xf32> to vector<8x8x1xf32>
    %cst_6 = arith.constant 9.99999996E-13 : f32
    %10 = vector.broadcast %cst_6 : f32 to vector<8x8x1xf32>
    %11 = arith.maximumf %9, %10 : vector<8x8x1xf32>
    %12 = vector.broadcast %11 : vector<8x8x1xf32> to vector<8x8x8xf32>
    %13 = arith.divf %6, %12 : vector<8x8x8xf32>
    "tpu.trace_start"() <{level = 10 : i32, message = "gij,gjf->gif"}> : () -> ()
    %cst_7 = arith.constant dense<0.000000e+00> : vector<8x8x16xf32>
    %14 = tpu.matmul %13, %0, %cst_7 {dimension_numbers = #tpu.dot_dimension_numbers<[2], [1], [1], [2], [0, 0, 0, 1, 1, 2], [0], [0]>} : vector<8x8x8xf32>, vector<8x8x16xf32>, vector<8x8x16xf32> -> vector<8x8x16xf32>
    "tpu.trace_stop"() : () -> ()
    %15 = tpu.concatenate %0, %14 in 2 : vector<8x8x16xf32>, vector<8x8x16xf32> -> vector<8x8x32xf32>
    %16 = vector.shape_cast %15 : vector<8x8x32xf32> to vector<64x32xf32>
    %c0_8 = arith.constant 0 : index
    %c0_9 = arith.constant 0 : index
    %17 = vector.load %arg3[%c0_8, %c0_9] : memref<112x64xf32, #tpu.memory_space<vmem>>, vector<32x64xf32>
    %cst_10 = arith.constant dense<0.000000e+00> : vector<64x64xf32>
    %18 = tpu.matmul %16, %17, %cst_10 {dimension_numbers = #tpu.dot_dimension_numbers<[1], [0], [0], [1], [0, 0, 1, 1], [], []>} : vector<64x32xf32>, vector<32x64xf32>, vector<64x64xf32> -> vector<64x64xf32>
    %19 = vector.shape_cast %18 : vector<64x64xf32> to vector<8x8x64xf32>
    %c32 = arith.constant 32 : index
    %c0_11 = arith.constant 0 : index
    %20 = vector.load %arg3[%c32, %c0_11] : memref<112x64xf32, #tpu.memory_space<vmem>>, vector<1x64xf32>
    %c33 = arith.constant 33 : index
    %c0_12 = arith.constant 0 : index
    %21 = vector.load %arg3[%c33, %c0_12] : memref<112x64xf32, #tpu.memory_space<vmem>>, vector<1x64xf32>
    %cst_13 = arith.constant dense<0.000000e+00> : vector<8x64xf32>
    %22 = vector.multi_reduction <add>, %19, %cst_13 [1] : vector<8x8x64xf32> to vector<8x64xf32>
    %23 = vector.shape_cast %22 : vector<8x64xf32> to vector<8x1x64xf32>
    %cst_14 = arith.constant 8.000000e+00 : f32
    %24 = vector.broadcast %cst_14 : f32 to vector<8x1x64xf32>
    %25 = arith.divf %23, %24 : vector<8x1x64xf32>
    %26 = vector.broadcast %25 : vector<8x1x64xf32> to vector<8x8x64xf32>
    %27 = arith.subf %19, %26 : vector<8x8x64xf32>
    %28 = arith.mulf %27, %27 : vector<8x8x64xf32>
    %cst_15 = arith.constant dense<0.000000e+00> : vector<8x64xf32>
    %29 = vector.multi_reduction <add>, %28, %cst_15 [1] : vector<8x8x64xf32> to vector<8x64xf32>
    %30 = vector.shape_cast %29 : vector<8x64xf32> to vector<8x1x64xf32>
    %cst_16 = arith.constant 8.000000e+00 : f32
    %31 = vector.broadcast %cst_16 : f32 to vector<8x1x64xf32>
    %32 = arith.divf %30, %31 : vector<8x1x64xf32>
    %cst_17 = arith.constant 9.99999974E-6 : f32
    %33 = vector.broadcast %cst_17 : f32 to vector<8x1x64xf32>
    %34 = arith.addf %32, %33 : vector<8x1x64xf32>
    %35 = math.rsqrt %34 : vector<8x1x64xf32>
    %36 = vector.shape_cast %20 : vector<1x64xf32> to vector<1x1x64xf32>
    %37 = vector.broadcast %36 : vector<1x1x64xf32> to vector<8x1x64xf32>
    %38 = arith.mulf %37, %35 : vector<8x1x64xf32>
    %39 = arith.mulf %25, %38 : vector<8x1x64xf32>
    %40 = vector.shape_cast %21 : vector<1x64xf32> to vector<1x1x64xf32>
    %41 = vector.broadcast %40 : vector<1x1x64xf32> to vector<8x1x64xf32>
    %42 = arith.subf %41, %39 : vector<8x1x64xf32>
    %43 = vector.broadcast %38 : vector<8x1x64xf32> to vector<8x8x64xf32>
    %44 = arith.mulf %19, %43 : vector<8x8x64xf32>
    %45 = vector.broadcast %42 : vector<8x1x64xf32> to vector<8x8x64xf32>
    %46 = arith.addf %44, %45 : vector<8x8x64xf32>
    %cst_18 = arith.constant 0.000000e+00 : f32
    %47 = vector.broadcast %cst_18 : f32 to vector<8x8x64xf32>
    %48 = arith.cmpf oge, %46, %47 : vector<8x8x64xf32>
    %cst_19 = arith.constant 0.00999999977 : f32
    %49 = vector.broadcast %cst_19 : f32 to vector<8x8x64xf32>
    %50 = arith.mulf %49, %46 : vector<8x8x64xf32>
    %51 = arith.select %48, %46, %50 : vector<8x8x64xi1>, vector<8x8x64xf32>
    %c40 = arith.constant 40 : index
    %c0_20 = arith.constant 0 : index
    %52 = vector.load %arg3[%c40, %c0_20] : memref<112x64xf32, #tpu.memory_space<vmem>>, vector<64x32xf32>
    %53 = vector.shape_cast %51 : vector<8x8x64xf32> to vector<64x64xf32>
    %cst_21 = arith.constant dense<0.000000e+00> : vector<64x32xf32>
    %54 = tpu.matmul %53, %52, %cst_21 {dimension_numbers = #tpu.dot_dimension_numbers<[1], [0], [0], [1], [0, 0, 1, 1], [], []>} : vector<64x64xf32>, vector<64x32xf32>, vector<64x32xf32> -> vector<64x32xf32>
    %55 = vector.shape_cast %54 : vector<64x32xf32> to vector<8x8x32xf32>
    %c104 = arith.constant 104 : index
    %c0_22 = arith.constant 0 : index
    %56 = vector.load %arg3[%c104, %c0_22] : memref<112x64xf32, #tpu.memory_space<vmem>>, vector<1x32xf32>
    %c105 = arith.constant 105 : index
    %c0_23 = arith.constant 0 : index
    %57 = vector.load %arg3[%c105, %c0_23] : memref<112x64xf32, #tpu.memory_space<vmem>>, vector<1x32xf32>
    %cst_24 = arith.constant dense<0.000000e+00> : vector<8x32xf32>
    %58 = vector.multi_reduction <add>, %55, %cst_24 [1] : vector<8x8x32xf32> to vector<8x32xf32>
    %59 = vector.shape_cast %58 : vector<8x32xf32> to vector<8x1x32xf32>
    %cst_25 = arith.constant 8.000000e+00 : f32
    %60 = vector.broadcast %cst_25 : f32 to vector<8x1x32xf32>
    %61 = arith.divf %59, %60 : vector<8x1x32xf32>
    %62 = vector.broadcast %61 : vector<8x1x32xf32> to vector<8x8x32xf32>
    %63 = arith.subf %55, %62 : vector<8x8x32xf32>
    %64 = arith.mulf %63, %63 : vector<8x8x32xf32>
    %cst_26 = arith.constant dense<0.000000e+00> : vector<8x32xf32>
    %65 = vector.multi_reduction <add>, %64, %cst_26 [1] : vector<8x8x32xf32> to vector<8x32xf32>
    %66 = vector.shape_cast %65 : vector<8x32xf32> to vector<8x1x32xf32>
    %cst_27 = arith.constant 8.000000e+00 : f32
    %67 = vector.broadcast %cst_27 : f32 to vector<8x1x32xf32>
    %68 = arith.divf %66, %67 : vector<8x1x32xf32>
    %cst_28 = arith.constant 9.99999974E-6 : f32
    %69 = vector.broadcast %cst_28 : f32 to vector<8x1x32xf32>
    %70 = arith.addf %68, %69 : vector<8x1x32xf32>
    %71 = math.rsqrt %70 : vector<8x1x32xf32>
    %72 = vector.shape_cast %56 : vector<1x32xf32> to vector<1x1x32xf32>
    %73 = vector.broadcast %72 : vector<1x1x32xf32> to vector<8x1x32xf32>
    %74 = arith.mulf %73, %71 : vector<8x1x32xf32>
    %75 = arith.mulf %61, %74 : vector<8x1x32xf32>
    %76 = vector.shape_cast %57 : vector<1x32xf32> to vector<1x1x32xf32>
    %77 = vector.broadcast %76 : vector<1x1x32xf32> to vector<8x1x32xf32>
    %78 = arith.subf %77, %75 : vector<8x1x32xf32>
    %79 = vector.broadcast %74 : vector<8x1x32xf32> to vector<8x8x32xf32>
    %80 = arith.mulf %55, %79 : vector<8x8x32xf32>
    %81 = vector.broadcast %78 : vector<8x1x32xf32> to vector<8x8x32xf32>
    %82 = arith.addf %80, %81 : vector<8x8x32xf32>
    %c0_29 = arith.constant 0 : index
    %c0_30 = arith.constant 0 : index
    %c0_31 = arith.constant 0 : index
    %83 = vector.load %arg4[%c0_29, %c0_30, %c0_31] : memref<8x8x32xf32, #tpu.memory_space<vmem>>, vector<8x8x32xf32>
    tpu.vector_store %arg4[%c0_29, %c0_30, %c0_31], %82 {strides = array<i32>} : memref<8x8x32xf32, #tpu.memory_space<vmem>>, vector<8x8x32xf32>,
    return
  }
  func.func @transform_0(%arg0: i32) -> (i32, i32, i32) {
    %c0_i32 = arith.constant 0 : i32
    %c0_i32_0 = arith.constant 0 : i32
    %c0_i32_1 = arith.constant 0 : i32
    return %arg0, %c0_i32, %c0_i32_0 : i32, i32, i32
  }
  func.func @transform_1(%arg0: i32) -> (i32, i32, i32) {
    %c0_i32 = arith.constant 0 : i32
    %c0_i32_0 = arith.constant 0 : i32
    %c0_i32_1 = arith.constant 0 : i32
    return %arg0, %c0_i32, %c0_i32_0 : i32, i32, i32
  }
  func.func @transform_2(%arg0: i32) -> (i32, i32) {
    %c0_i32 = arith.constant 0 : i32
    %c0_i32_0 = arith.constant 0 : i32
    %c0_i32_1 = arith.constant 0 : i32
    return %c0_i32, %c0_i32_0 : i32, i32
  }
  func.func @transform_3(%arg0: i32) -> (i32, i32, i32) {
    %c0_i32 = arith.constant 0 : i32
    %c0_i32_0 = arith.constant 0 : i32
    %c0_i32_1 = arith.constant 0 : i32
    return %arg0, %c0_i32, %c0_i32_0 : i32, i32, i32
  }
}

</mosaic_0001>

<llo_original>
// kernel: tpu_custom_call.1
$region0: #{tpu_custom_call.1}
  #allocation0 [shape = 'u32[]', space=smem, size = 0x4, offset = 0x4, fixed_abs, tag = 'smem constant byte address 0x4 - core index']
  #allocation1 [shape = 'u32[144,128]{1,0:T(1,128)}', space=vmem, size = 0x12000, scoped, tag = 'internal scratch']
  %s0 = inlined_call_operand.vmem [shape: f32[8,8,16], index: 0, kind: input, shape index: {}]
  %s1 = inlined_call_operand.vmem [shape: f32[8,8,8], index: 1, kind: input, shape index: {}]
  %s2 = inlined_call_operand.vmem [shape: f32[112,64], index: 2, kind: input, shape index: {}]
  %s3 = inlined_call_operand.hbm [shape: f32[8,8,32], index: 3, kind: output, shape index: {}]
  %s4 = sld [smem:[#allocation0]]
  $region22: #{tpu_custom_call.1} parent=0
    _
  %s6 = ssub.s32 1, %s4
  %s7 = scalar_select 0, %s6, %s4
  $region1: #{tpu_custom_call.1} parent=0
    #allocation2 [shape = 'u8[32768]{0}', space=vmem, size = 0x8000, scoped, tag = 'output window, operand 0, single buffered']
    #allocation3 [shape = 's32[1]{0}', space=sflag, size = 0x4, scoped, tag = 'scoped memory for tpu_custom_call.1']
    %8 = vsyncpa [#allocation3], 0
    // Predicated region
    $region2: #{tpu_custom_call.1} parent=1 // pred_check
      _
    $region3: #{tpu_custom_call.1} parent=1 // pred_check_branch
      %10 = sbr.rel (0) target = $region5
    $region4: #{tpu_custom_call.1} parent=1 // pred_region
      _
    $region5: #{tpu_custom_call.1} parent=1 // pred_fallthru
      _
    // Predicated region
    $region6: #{tpu_custom_call.1} parent=1 // pred_check
      _
    $region7: #{tpu_custom_call.1} parent=1 // pred_check_branch
      %12 = sbr.rel (0) target = $region9
    $region8: #{tpu_custom_call.1} parent=1 // pred_region
      _
    $region9: #{tpu_custom_call.1} parent=1 // pred_fallthru
      _
    // Predicated region
    $region10: #{tpu_custom_call.1} parent=1 // pred_check
      _
    $region11: #{tpu_custom_call.1} parent=1 // pred_check_branch
      %14 = sbr.rel (0) target = $region13
    $region12: #{tpu_custom_call.1} parent=1 // pred_region
      _
    $region13: #{tpu_custom_call.1} parent=1 // pred_fallthru
      _
    %v15 = vld [vmem:[%s0] sm:$0xff]
    %v16 = vld [vmem:[%s0 + $0x8] sm:$0xff]
    %v17 = vld [vmem:[%s0 + $0x10] sm:$0xff]
    %v18 = vld [vmem:[%s0 + $0x18] sm:$0xff]
    %v19 = vld [vmem:[%s0 + $0x20] sm:$0xff]
    %v20 = vld [vmem:[%s0 + $0x28] sm:$0xff]
    %v21 = vld [vmem:[%s0 + $0x30] sm:$0xff]
    %v22 = vld [vmem:[%s0 + $0x38] sm:$0xff]
    %v23 = vld [vmem:[%s1] sm:$0xff]
    %v24 = vld [vmem:[%s1 + $0x8] sm:$0xff]
    %v25 = vld [vmem:[%s1 + $0x10] sm:$0xff]
    %v26 = vld [vmem:[%s1 + $0x18] sm:$0xff]
    %v27 = vld [vmem:[%s1 + $0x20] sm:$0xff]
    %v28 = vld [vmem:[%s1 + $0x28] sm:$0xff]
    %v29 = vld [vmem:[%s1 + $0x30] sm:$0xff]
    %v30 = vld [vmem:[%s1 + $0x38] sm:$0xff]
    %v31 = vlaneseq
    %v32 = vshrl.u32 %v31, 7
    %v33 = vlaneseq
    %v34 = vand.u32 %v33, 127
    %vm35 = vcmp.eq.s32.totalorder %v32, %v34
    %v36 = vsel %vm35, 0.0, %v23
    %v37 = vsel %vm35, 0.0, %v24
    %v38 = vsel %vm35, 0.0, %v25
    %v39 = vsel %vm35, 0.0, %v26
    %v40 = vsel %vm35, 0.0, %v27
    %v41 = vsel %vm35, 0.0, %v28
    %v42 = vsel %vm35, 0.0, %v29
    %v43 = vsel %vm35, 0.0, %v30
    %v44 = vand.u32 2147483647, %v36
    %v45 = vand.u32 2147483647, %v37
    %v46 = vand.u32 2147483647, %v38
    %v47 = vand.u32 2147483647, %v39
    %v48 = vand.u32 2147483647, %v40
    %v49 = vand.u32 2147483647, %v41
    %v50 = vand.u32 2147483647, %v42
    %v51 = vand.u32 2147483647, %v43
    %vm52 = vcmask 64512
    %v53 = vsel %vm52, %v44, 0.0
    %54 = vadd.xlane.f32.xlu0 %v53
    %v55 = vpop.xlane.xlu0 %54
    %v56 = vsel %vm52, %v45, 0.0
    %57 = vadd.xlane.f32.xlu0 %v56
    %v58 = vpop.xlane.xlu0 %57
    %v59 = vsel %vm52, %v46, 0.0
    %60 = vadd.xlane.f32.xlu0 %v59
    %v61 = vpop.xlane.xlu0 %60
    %v62 = vsel %vm52, %v47, 0.0
    %63 = vadd.xlane.f32.xlu0 %v62
    %v64 = vpop.xlane.xlu0 %63
    %v65 = vsel %vm52, %v48, 0.0
    %66 = vadd.xlane.f32.xlu0 %v65
    %v67 = vpop.xlane.xlu0 %66
    %v68 = vsel %vm52, %v49, 0.0
    %69 = vadd.xlane.f32.xlu0 %v68
    %v70 = vpop.xlane.xlu0 %69
    %v71 = vsel %vm52, %v50, 0.0
    %72 = vadd.xlane.f32.xlu0 %v71
    %v73 = vpop.xlane.xlu0 %72
    %v74 = vsel %vm52, %v51, 0.0
    %75 = vadd.xlane.f32.xlu0 %v74
    %v76 = vpop.xlane.xlu0 %75
    %v77 = vmax.f32 %v55, 1e-12
    %v78 = vmax.f32 %v58, 1e-12
    %v79 = vmax.f32 %v61, 1e-12
    %v80 = vmax.f32 %v64, 1e-12
    %v81 = vmax.f32 %v67, 1e-12
    %v82 = vmax.f32 %v70, 1e-12
    %v83 = vmax.f32 %v73, 1e-12
    %v84 = vmax.f32 %v76, 1e-12
    %v85 = vrcp.pop %v77
    %v86 = vmul.f32 %v36, %v85
    %v87 = vrcp.pop %v78
    %v88 = vmul.f32 %v37, %v87
    %v89 = vrcp.pop %v79
    %v90 = vmul.f32 %v38, %v89
    %v91 = vrcp.pop %v80
    %v92 = vmul.f32 %v39, %v91
    %v93 = vrcp.pop %v81
    %v94 = vmul.f32 %v40, %v93
    %v95 = vrcp.pop %v82
    %v96 = vmul.f32 %v41, %v95
    %v97 = vrcp.pop %v83
    %v98 = vmul.f32 %v42, %v97
    %v99 = vrcp.pop %v84
    %v100 = vmul.f32 %v43, %v99
    %v102 = vsel %vm52, %v86, 0
    %104 = vmatprep.subr.mxu0 0.0
    %105 = vmatpush1.msra.mxu0 0.0
    %106 = vmatprep.subr.mxu0 0.0
    %107 = vmatpush1.msra.mxu0 0.0
    %108 = vmatprep.subr.mxu0 0.0
    %109 = vmatpush1.msra.mxu0 0.0
    %110 = vmatprep.subr.mxu0 0.0
    %111 = vmatpush1.msra.mxu0 0.0
    %112 = vmatprep.subr.mxu0 0.0
    %113 = vmatpush1.msra.mxu0 0.0
    %114 = vmatprep.subr.mxu0 0.0
    %115 = vmatpush1.msra.mxu0 0.0
    %116 = vmatprep.subr.mxu0 0.0
    %117 = vmatpush1.msra.mxu0 0.0
    %118 = vmatprep.subr.mxu0 0.0
    %119 = vmatpush1.msra.mxu0 0.0
    %120 = vmatprep.subr.mxu0 0.0
    %121 = vmatpush1.msra.mxu0 0.0
    %122 = vmatprep.subr.mxu0 0.0
    %123 = vmatpush1.msra.mxu0 0.0
    %124 = vmatprep.subr.mxu0 0.0
    %125 = vmatpush1.msra.mxu0 0.0
    %126 = vmatprep.subr.mxu0 0.0
    %127 = vmatpush1.msra.mxu0 0.0
    %128 = vmatprep.subr.mxu0 0.0
    %129 = vmatpush1.msra.mxu0 0.0
    %130 = vmatprep.subr.mxu0 0.0
    %131 = vmatpush1.msra.mxu0 0.0
    %132 = vmatprep.subr.mxu0 0.0
    %133 = vmatpush1.msra.mxu0 0.0
    %134 = vmatprep.subr.mxu0 0.0
    %135 = vmatpush1.msra.mxu0 %v15
    %136 = vmatprep.subr.mxu0 0.0
    %137 = vmatpush2.msra.mxu0 0.0
    %138 = vmatprep.subr.mxu0 0.0
    %139 = vmatpush2.msra.mxu0 0.0
    %140 = vmatprep.subr.mxu0 0.0
    %141 = vmatpush2.msra.mxu0 0.0
    %142 = vmatprep.subr.mxu0 0.0
    %143 = vmatpush2.msra.mxu0 0.0
    %144 = vmatprep.subr.mxu0 0.0
    %145 = vmatpush2.msra.mxu0 0.0
    %146 = vmatprep.subr.mxu0 0.0
    %147 = vmatpush2.msra.mxu0 0.0
    %148 = vmatprep.subr.mxu0 0.0
    %149 = vmatpush2.msra.mxu0 0.0
    %150 = vmatprep.subr.mxu0 0.0
    %151 = vmatpush2.msra.mxu0 0.0
    %152 = vmatprep.subr.mxu0 0.0
    %153 = vmatpush2.msra.mxu0 0.0
    %154 = vmatprep.subr.mxu0 0.0
    %155 = vmatpush2.msra.mxu0 0.0
    %156 = vmatprep.subr.mxu0 0.0
    %157 = vmatpush2.msra.mxu0 0.0
    %158 = vmatprep.subr.mxu0 0.0
    %159 = vmatpush2.msra.mxu0 0.0
    %160 = vmatprep.subr.mxu0 0.0
    %161 = vmatpush2.msra.mxu0 0.0
    %162 = vmatprep.subr.mxu0 0.0
    %163 = vmatpush2.msra.mxu0 0.0
    %164 = vmatprep.subr.mxu0 0.0
    %165 = vmatpush2.msra.mxu0 0.0
    %166 = vmatprep.subr.mxu0 0.0
    %167 = vmatpush2.msra.mxu0 0.0
    %168 = vmatprep.mubr.f32.mxu0 0.0
    %169 = vmatmul.mubr.f32.gmra.mxu0 %v102
    %v170 = vpop.f32.mrf.mxu0
    %v171 = vadd.f32 0.0, %v170
    %v172 = vpop.f32.mrf.mxu0
    %173 = vdwg.mxu0
    %v175 = vsel %vm52, %v88, 0
    %177 = vmatprep.subr.mxu0 0.0
    %178 = vmatpush1.msra.mxu0 0.0
    %179 = vmatprep.subr.mxu0 0.0
    %180 = vmatpush1.msra.mxu0 0.0
    %181 = vmatprep.subr.mxu0 0.0
    %182 = vmatpush1.msra.mxu0 0.0
    %183 = vmatprep.subr.mxu0 0.0
    %184 = vmatpush1.msra.mxu0 0.0
    %185 = vmatprep.subr.mxu0 0.0
    %186 = vmatpush1.msra.mxu0 0.0
    %187 = vmatprep.subr.mxu0 0.0
    %188 = vmatpush1.msra.mxu0 0.0
    %189 = vmatprep.subr.mxu0 0.0
    %190 = vmatpush1.msra.mxu0 0.0
    %191 = vmatprep.subr.mxu0 0.0
    %192 = vmatpush1.msra.mxu0 0.0
    %193 = vmatprep.subr.mxu0 0.0
    %194 = vmatpush1.msra.mxu0 0.0
    %195 = vmatprep.subr.mxu0 0.0
    %196 = vmatpush1.msra.mxu0 0.0
    %197 = vmatprep.subr.mxu0 0.0
    %198 = vmatpush1.msra.mxu0 0.0
    %199 = vmatprep.subr.mxu0 0.0
    %200 = vmatpush1.msra.mxu0 0.0
    %201 = vmatprep.subr.mxu0 0.0
    %202 = vmatpush1.msra.mxu0 0.0
    %203 = vmatprep.subr.mxu0 0.0
    %204 = vmatpush1.msra.mxu0 0.0
    %205 = vmatprep.subr.mxu0 0.0
    %206 = vmatpush1.msra.mxu0 0.0
    %207 = vmatprep.subr.mxu0 0.0
    %208 = vmatpush1.msra.mxu0 %v16
    %209 = vmatprep.subr.mxu0 0.0
    %210 = vmatpush2.msra.mxu0 0.0
    %211 = vmatprep.subr.mxu0 0.0
    %212 = vmatpush2.msra.mxu0 0.0
    %213 = vmatprep.subr.mxu0 0.0
    %214 = vmatpush2.msra.mxu0 0.0
    %215 = vmatprep.subr.mxu0 0.0
    %216 = vmatpush2.msra.mxu0 0.0
    %217 = vmatprep.subr.mxu0 0.0
    %218 = vmatpush2.msra.mxu0 0.0
    %219 = vmatprep.subr.mxu0 0.0
    %220 = vmatpush2.msra.mxu0 0.0
    %221 = vmatprep.subr.mxu0 0.0
    %222 = vmatpush2.msra.mxu0 0.0
    %223 = vmatprep.subr.mxu0 0.0
    %224 = vmatpush2.msra.mxu0 0.0
    %225 = vmatprep.subr.mxu0 0.0
    %226 = vmatpush2.msra.mxu0 0.0
    %227 = vmatprep.subr.mxu0 0.0
    %228 = vmatpush2.msra.mxu0 0.0
    %229 = vmatprep.subr.mxu0 0.0
    %230 = vmatpush2.msra.mxu0 0.0
    %231 = vmatprep.subr.mxu0 0.0
    %232 = vmatpush2.msra.mxu0 0.0
    %233 = vmatprep.subr.mxu0 0.0
    %234 = vmatpush2.msra.mxu0 0.0
    %235 = vmatprep.subr.mxu0 0.0
    %236 = vmatpush2.msra.mxu0 0.0
    %237 = vmatprep.subr.mxu0 0.0
    %238 = vmatpush2.msra.mxu0 0.0
    %239 = vmatprep.subr.mxu0 0.0
    %240 = vmatpush2.msra.mxu0 0.0
    %241 = vmatprep.mubr.f32.mxu0 0.0
    %242 = vmatmul.mubr.f32.gmra.mxu0 %v175
    %v243 = vpop.f32.mrf.mxu0
    %v244 = vadd.f32 0.0, %v243
    %v245 = vpop.f32.mrf.mxu0
    %246 = vdwg.mxu0
    %v248 = vsel %vm52, %v90, 0
    %250 = vmatprep.subr.mxu0 0.0
    %251 = vmatpush1.msra.mxu0 0.0
    %252 = vmatprep.subr.mxu0 0.0
    %253 = vmatpush1.msra.mxu0 0.0
    %254 = vmatprep.subr.mxu0 0.0
    %255 = vmatpush1.msra.mxu0 0.0
    %256 = vmatprep.subr.mxu0 0.0
    %257 = vmatpush1.msra.mxu0 0.0
    %258 = vmatprep.subr.mxu0 0.0
    %259 = vmatpush1.msra.mxu0 0.0
    %260 = vmatprep.subr.mxu0 0.0
    %261 = vmatpush1.msra.mxu0 0.0
    %262 = vmatprep.subr.mxu0 0.0
    %263 = vmatpush1.msra.mxu0 0.0
    %264 = vmatprep.subr.mxu0 0.0
    %265 = vmatpush1.msra.mxu0 0.0
    %266 = vmatprep.subr.mxu0 0.0
    %267 = vmatpush1.msra.mxu0 0.0
    %268 = vmatprep.subr.mxu0 0.0
    %269 = vmatpush1.msra.mxu0 0.0
    %270 = vmatprep.subr.mxu0 0.0
    %271 = vmatpush1.msra.mxu0 0.0
    %272 = vmatprep.subr.mxu0 0.0
    %273 = vmatpush1.msra.mxu0 0.0
    %274 = vmatprep.subr.mxu0 0.0
    %275 = vmatpush1.msra.mxu0 0.0
    %276 = vmatprep.subr.mxu0 0.0
    %277 = vmatpush1.msra.mxu0 0.0
    %278 = vmatprep.subr.mxu0 0.0
    %279 = vmatpush1.msra.mxu0 0.0
    %280 = vmatprep.subr.mxu0 0.0
    %281 = vmatpush1.msra.mxu0 %v17
    %282 = vmatprep.subr.mxu0 0.0
    %283 = vmatpush2.msra.mxu0 0.0
    %284 = vmatprep.subr.mxu0 0.0
    %285 = vmatpush2.msra.mxu0 0.0
    %286 = vmatprep.subr.mxu0 0.0
    %287 = vmatpush2.msra.mxu0 0.0
    %288 = vmatprep.subr.mxu0 0.0
    %289 = vmatpush2.msra.mxu0 0.0
    %290 = vmatprep.subr.mxu0 0.0
    %291 = vmatpush2.msra.mxu0 0.0
    %292 = vmatprep.subr.mxu0 0.0
    %293 = vmatpush2.msra.mxu0 0.0
    %294 = vmatprep.subr.mxu0 0.0
    %295 = vmatpush2.msra.mxu0 0.0
    %296 = vmatprep.subr.mxu0 0.0
    %297 = vmatpush2.msra.mxu0 0.0
    %298 = vmatprep.subr.mxu0 0.0
    %299 = vmatpush2.msra.mxu0 0.0
    %300 = vmatprep.subr.mxu0 0.0
    %301 = vmatpush2.msra.mxu0 0.0
    %302 = vmatprep.subr.mxu0 0.0
    %303 = vmatpush2.msra.mxu0 0.0
    %304 = vmatprep.subr.mxu0 0.0
    %305 = vmatpush2.msra.mxu0 0.0
    %306 = vmatprep.subr.mxu0 0.0
    %307 = vmatpush2.msra.mxu0 0.0
    %308 = vmatprep.subr.mxu0 0.0
    %309 = vmatpush2.msra.mxu0 0.0
    %310 = vmatprep.subr.mxu0 0.0
    %311 = vmatpush2.msra.mxu0 0.0
    %312 = vmatprep.subr.mxu0 0.0
    %313 = vmatpush2.msra.mxu0 0.0
    %314 = vmatprep.mubr.f32.mxu0 0.0
    %315 = vmatmul.mubr.f32.gmra.mxu0 %v248
    %v316 = vpop.f32.mrf.mxu0
    %v317 = vadd.f32 0.0, %v316
    %v318 = vpop.f32.mrf.mxu0
    %319 = vdwg.mxu0
    %v321 = vsel %vm52, %v92, 0
    %323 = vmatprep.subr.mxu0 0.0
    %324 = vmatpush1.msra.mxu0 0.0
    %325 = vmatprep.subr.mxu0 0.0
    %326 = vmatpush1.msra.mxu0 0.0
    %327 = vmatprep.subr.mxu0 0.0
    %328 = vmatpush1.msra.mxu0 0.0
    %329 = vmatprep.subr.mxu0 0.0
    %330 = vmatpush1.msra.mxu0 0.0
    %331 = vmatprep.subr.mxu0 0.0
    %332 = vmatpush1.msra.mxu0 0.0
    %333 = vmatprep.subr.mxu0 0.0
    %334 = vmatpush1.msra.mxu0 0.0
    %335 = vmatprep.subr.mxu0 0.0
    %336 = vmatpush1.msra.mxu0 0.0
    %337 = vmatprep.subr.mxu0 0.0
    %338 = vmatpush1.msra.mxu0 0.0
    %339 = vmatprep.subr.mxu0 0.0
    %340 = vmatpush1.msra.mxu0 0.0
    %341 = vmatprep.subr.mxu0 0.0
    %342 = vmatpush1.msra.mxu0 0.0
    %343 = vmatprep.subr.mxu0 0.0
    %344 = vmatpush1.msra.mxu0 0.0
    %345 = vmatprep.subr.mxu0 0.0
    %346 = vmatpush1.msra.mxu0 0.0
    %347 = vmatprep.subr.mxu0 0.0
    %348 = vmatpush1.msra.mxu0 0.0
    %349 = vmatprep.subr.mxu0 0.0
    %350 = vmatpush1.msra.mxu0 0.0
    %351 = vmatprep.subr.mxu0 0.0
    %352 = vmatpush1.msra.mxu0 0.0
    %353 = vmatprep.subr.mxu0 0.0
    %354 = vmatpush1.msra.mxu0 %v18
    %355 = vmatprep.subr.mxu0 0.0
    %356 = vmatpush2.msra.mxu0 0.0
    %357 = vmatprep.subr.mxu0 0.0
    %358 = vmatpush2.msra.mxu0 0.0
    %359 = vmatprep.subr.mxu0 0.0
    %360 = vmatpush2.msra.mxu0 0.0
    %361 = vmatprep.subr.mxu0 0.0
    %362 = vmatpush2.msra.mxu0 0.0
    %363 = vmatprep.subr.mxu0 0.0
    %364 = vmatpush2.msra.mxu0 0.0
    %365 = vmatprep.subr.mxu0 0.0
    %366 = vmatpush2.msra.mxu0 0.0
    %367 = vmatprep.subr.mxu0 0.0
    %368 = vmatpush2.msra.mxu0 0.0
    %369 = vmatprep.subr.mxu0 0.0
    %370 = vmatpush2.msra.mxu0 0.0
    %371 = vmatprep.subr.mxu0 0.0
    %372 = vmatpush2.msra.mxu0 0.0
    %373 = vmatprep.subr.mxu0 0.0
    %374 = vmatpush2.msra.mxu0 0.0
    %375 = vmatprep.subr.mxu0 0.0
    %376 = vmatpush2.msra.mxu0 0.0
    %377 = vmatprep.subr.mxu0 0.0
    %378 = vmatpush2.msra.mxu0 0.0
    %379 = vmatprep.subr.mxu0 0.0
    %380 = vmatpush2.msra.mxu0 0.0
    %381 = vmatprep.subr.mxu0 0.0
    %382 = vmatpush2.msra.mxu0 0.0
    %383 = vmatprep.subr.mxu0 0.0
    %384 = vmatpush2.msra.mxu0 0.0
    %385 = vmatprep.subr.mxu0 0.0
    %386 = vmatpush2.msra.mxu0 0.0
    %387 = vmatprep.mubr.f32.mxu0 0.0
    %388 = vmatmul.mubr.f32.gmra.mxu0 %v321
    %v389 = vpop.f32.mrf.mxu0
    %v390 = vadd.f32 0.0, %v389
    %v391 = vpop.f32.mrf.mxu0
    %392 = vdwg.mxu0
    %v394 = vsel %vm52, %v94, 0
    %396 = vmatprep.subr.mxu0 0.0
    %397 = vmatpush1.msra.mxu0 0.0
    %398 = vmatprep.subr.mxu0 0.0
    %399 = vmatpush1.msra.mxu0 0.0
    %400 = vmatprep.subr.mxu0 0.0
    %401 = vmatpush1.msra.mxu0 0.0
    %402 = vmatprep.subr.mxu0 0.0
    %403 = vmatpush1.msra.mxu0 0.0
    %404 = vmatprep.subr.mxu0 0.0
    %405 = vmatpush1.msra.mxu0 0.0
    %406 = vmatprep.subr.mxu0 0.0
    %407 = vmatpush1.msra.mxu0 0.0
    %408 = vmatprep.subr.mxu0 0.0
    %409 = vmatpush1.msra.mxu0 0.0
    %410 = vmatprep.subr.mxu0 0.0
    %411 = vmatpush1.msra.mxu0 0.0
    %412 = vmatprep.subr.mxu0 0.0
    %413 = vmatpush1.msra.mxu0 0.0
    %414 = vmatprep.subr.mxu0 0.0
    %415 = vmatpush1.msra.mxu0 0.0
    %416 = vmatprep.subr.mxu0 0.0
    %417 = vmatpush1.msra.mxu0 0.0
    %418 = vmatprep.subr.mxu0 0.0
    %419 = vmatpush1.msra.mxu0 0.0
    %420 = vmatprep.subr.mxu0 0.0
    %421 = vmatpush1.msra.mxu0 0.0
    %422 = vmatprep.subr.mxu0 0.0
    %423 = vmatpush1.msra.mxu0 0.0
    %424 = vmatprep.subr.mxu0 0.0
    %425 = vmatpush1.msra.mxu0 0.0
    %426 = vmatprep.subr.mxu0 0.0
    %427 = vmatpush1.msra.mxu0 %v19
    %428 = vmatprep.subr.mxu0 0.0
    %429 = vmatpush2.msra.mxu0 0.0
    %430 = vmatprep.subr.mxu0 0.0
    %431 = vmatpush2.msra.mxu0 0.0
    %432 = vmatprep.subr.mxu0 0.0
    %433 = vmatpush2.msra.mxu0 0.0
    %434 = vmatprep.subr.mxu0 0.0
    %435 = vmatpush2.msra.mxu0 0.0
    %436 = vmatprep.subr.mxu0 0.0
    %437 = vmatpush2.msra.mxu0 0.0
    %438 = vmatprep.subr.mxu0 0.0
    %439 = vmatpush2.msra.mxu0 0.0
    %440 = vmatprep.subr.mxu0 0.0
    %441 = vmatpush2.msra.mxu0 0.0
    %442 = vmatprep.subr.mxu0 0.0
    %443 = vmatpush2.msra.mxu0 0.0
    %444 = vmatprep.subr.mxu0 0.0
    %445 = vmatpush2.msra.mxu0 0.0
    %446 = vmatprep.subr.mxu0 0.0
    %447 = vmatpush2.msra.mxu0 0.0
    %448 = vmatprep.subr.mxu0 0.0
    %449 = vmatpush2.msra.mxu0 0.0
    %450 = vmatprep.subr.mxu0 0.0
    %451 = vmatpush2.msra.mxu0 0.0
    %452 = vmatprep.subr.mxu0 0.0
    %453 = vmatpush2.msra.mxu0 0.0
    %454 = vmatprep.subr.mxu0 0.0
    %455 = vmatpush2.msra.mxu0 0.0
    %456 = vmatprep.subr.mxu0 0.0
    %457 = vmatpush2.msra.mxu0 0.0
    %458 = vmatprep.subr.mxu0 0.0
    %459 = vmatpush2.msra.mxu0 0.0
    %460 = vmatprep.mubr.f32.mxu0 0.0
    %461 = vmatmul.mubr.f32.gmra.mxu0 %v394
    %v462 = vpop.f32.mrf.mxu0
    %v463 = vadd.f32 0.0, %v462
    %v464 = vpop.f32.mrf.mxu0
    %465 = vdwg.mxu0
    %v467 = vsel %vm52, %v96, 0
    %469 = vmatprep.subr.mxu0 0.0
    %470 = vmatpush1.msra.mxu0 0.0
    %471 = vmatprep.subr.mxu0 0.0
    %472 = vmatpush1.msra.mxu0 0.0
    %473 = vmatprep.subr.mxu0 0.0
    %474 = vmatpush1.msra.mxu0 0.0
    %475 = vmatprep.subr.mxu0 0.0
    %476 = vmatpush1.msra.mxu0 0.0
    %477 = vmatprep.subr.mxu0 0.0
    %478 = vmatpush1.msra.mxu0 0.0
    %479 = vmatprep.subr.mxu0 0.0
    %480 = vmatpush1.msra.mxu0 0.0
    %481 = vmatprep.subr.mxu0 0.0
    %482 = vmatpush1.msra.mxu0 0.0
    %483 = vmatprep.subr.mxu0 0.0
    %484 = vmatpush1.msra.mxu0 0.0
    %485 = vmatprep.subr.mxu0 0.0
    %486 = vmatpush1.msra.mxu0 0.0
    %487 = vmatprep.subr.mxu0 0.0
    %488 = vmatpush1.msra.mxu0 0.0
    %489 = vmatprep.subr.mxu0 0.0
    %490 = vmatpush1.msra.mxu0 0.0
    %491 = vmatprep.subr.mxu0 0.0
    %492 = vmatpush1.msra.mxu0 0.0
    %493 = vmatprep.subr.mxu0 0.0
    %494 = vmatpush1.msra.mxu0 0.0
    %495 = vmatprep.subr.mxu0 0.0
    %496 = vmatpush1.msra.mxu0 0.0
    %497 = vmatprep.subr.mxu0 0.0
    %498 = vmatpush1.msra.mxu0 0.0
    %499 = vmatprep.subr.mxu0 0.0
    %500 = vmatpush1.msra.mxu0 %v20
    %501 = vmatprep.subr.mxu0 0.0
    %502 = vmatpush2.msra.mxu0 0.0
    %503 = vmatprep.subr.mxu0 0.0
    %504 = vmatpush2.msra.mxu0 0.0
    %505 = vmatprep.subr.mxu0 0.0
    %506 = vmatpush2.msra.mxu0 0.0
    %507 = vmatprep.subr.mxu0 0.0
    %508 = vmatpush2.msra.mxu0 0.0
    %509 = vmatprep.subr.mxu0 0.0
    %510 = vmatpush2.msra.mxu0 0.0
    %511 = vmatprep.subr.mxu0 0.0
    %512 = vmatpush2.msra.mxu0 0.0
    %513 = vmatprep.subr.mxu0 0.0
    %514 = vmatpush2.msra.mxu0 0.0
    %515 = vmatprep.subr.mxu0 0.0
    %516 = vmatpush2.msra.mxu0 0.0
    %517 = vmatprep.subr.mxu0 0.0
    %518 = vmatpush2.msra.mxu0 0.0
    %519 = vmatprep.subr.mxu0 0.0
    %520 = vmatpush2.msra.mxu0 0.0
    %521 = vmatprep.subr.mxu0 0.0
    %522 = vmatpush2.msra.mxu0 0.0
    %523 = vmatprep.subr.mxu0 0.0
    %524 = vmatpush2.msra.mxu0 0.0
    %525 = vmatprep.subr.mxu0 0.0
    %526 = vmatpush2.msra.mxu0 0.0
    %527 = vmatprep.subr.mxu0 0.0
    %528 = vmatpush2.msra.mxu0 0.0
    %529 = vmatprep.subr.mxu0 0.0
    %530 = vmatpush2.msra.mxu0 0.0
    %531 = vmatprep.subr.mxu0 0.0
    %532 = vmatpush2.msra.mxu0 0.0
    %533 = vmatprep.mubr.f32.mxu0 0.0
    %534 = vmatmul.mubr.f32.gmra.mxu0 %v467
    %v535 = vpop.f32.mrf.mxu0
    %v536 = vadd.f32 0.0, %v535
    %v537 = vpop.f32.mrf.mxu0
    %538 = vdwg.mxu0
    %v540 = vsel %vm52, %v98, 0
    %542 = vmatprep.subr.mxu0 0.0
    %543 = vmatpush1.msra.mxu0 0.0
    %544 = vmatprep.subr.mxu0 0.0
    %545 = vmatpush1.msra.mxu0 0.0
    %546 = vmatprep.subr.mxu0 0.0
    %547 = vmatpush1.msra.mxu0 0.0
    %548 = vmatprep.subr.mxu0 0.0
    %549 = vmatpush1.msra.mxu0 0.0
    %550 = vmatprep.subr.mxu0 0.0
    %551 = vmatpush1.msra.mxu0 0.0
    %552 = vmatprep.subr.mxu0 0.0
    %553 = vmatpush1.msra.mxu0 0.0
    %554 = vmatprep.subr.mxu0 0.0
    %555 = vmatpush1.msra.mxu0 0.0
    %556 = vmatprep.subr.mxu0 0.0
    %557 = vmatpush1.msra.mxu0 0.0
    %558 = vmatprep.subr.mxu0 0.0
    %559 = vmatpush1.msra.mxu0 0.0
    %560 = vmatprep.subr.mxu0 0.0
    %561 = vmatpush1.msra.mxu0 0.0
    %562 = vmatprep.subr.mxu0 0.0
    %563 = vmatpush1.msra.mxu0 0.0
    %564 = vmatprep.subr.mxu0 0.0
    %565 = vmatpush1.msra.mxu0 0.0
    %566 = vmatprep.subr.mxu0 0.0
    %567 = vmatpush1.msra.mxu0 0.0
    %568 = vmatprep.subr.mxu0 0.0
    %569 = vmatpush1.msra.mxu0 0.0
    %570 = vmatprep.subr.mxu0 0.0
    %571 = vmatpush1.msra.mxu0 0.0
    %572 = vmatprep.subr.mxu0 0.0
    %573 = vmatpush1.msra.mxu0 %v21
    %574 = vmatprep.subr.mxu0 0.0
    %575 = vmatpush2.msra.mxu0 0.0
    %576 = vmatprep.subr.mxu0 0.0
    %577 = vmatpush2.msra.mxu0 0.0
    %578 = vmatprep.subr.mxu0 0.0
    %579 = vmatpush2.msra.mxu0 0.0
    %580 = vmatprep.subr.mxu0 0.0
    %581 = vmatpush2.msra.mxu0 0.0
    %582 = vmatprep.subr.mxu0 0.0
    %583 = vmatpush2.msra.mxu0 0.0
    %584 = vmatprep.subr.mxu0 0.0
    %585 = vmatpush2.msra.mxu0 0.0
    %586 = vmatprep.subr.mxu0 0.0
    %587 = vmatpush2.msra.mxu0 0.0
    %588 = vmatprep.subr.mxu0 0.0
    %589 = vmatpush2.msra.mxu0 0.0
    %590 = vmatprep.subr.mxu0 0.0
    %591 = vmatpush2.msra.mxu0 0.0
    %592 = vmatprep.subr.mxu0 0.0
    %593 = vmatpush2.msra.mxu0 0.0
    %594 = vmatprep.subr.mxu0 0.0
    %595 = vmatpush2.msra.mxu0 0.0
    %596 = vmatprep.subr.mxu0 0.0
    %597 = vmatpush2.msra.mxu0 0.0
    %598 = vmatprep.subr.mxu0 0.0
    %599 = vmatpush2.msra.mxu0 0.0
    %600 = vmatprep.subr.mxu0 0.0
    %601 = vmatpush2.msra.mxu0 0.0
    %602 = vmatprep.subr.mxu0 0.0
    %603 = vmatpush2.msra.mxu0 0.0
    %604 = vmatprep.subr.mxu0 0.0
    %605 = vmatpush2.msra.mxu0 0.0
    %606 = vmatprep.mubr.f32.mxu0 0.0
    %607 = vmatmul.mubr.f32.gmra.mxu0 %v540
    %v608 = vpop.f32.mrf.mxu0
    %v609 = vadd.f32 0.0, %v608
    %v610 = vpop.f32.mrf.mxu0
    %611 = vdwg.mxu0
    %v613 = vsel %vm52, %v100, 0
    %615 = vmatprep.subr.mxu0 0.0
    %616 = vmatpush1.msra.mxu0 0.0
    %617 = vmatprep.subr.mxu0 0.0
    %618 = vmatpush1.msra.mxu0 0.0
    %619 = vmatprep.subr.mxu0 0.0
    %620 = vmatpush1.msra.mxu0 0.0
    %621 = vmatprep.subr.mxu0 0.0
    %622 = vmatpush1.msra.mxu0 0.0
    %623 = vmatprep.subr.mxu0 0.0
    %624 = vmatpush1.msra.mxu0 0.0
    %625 = vmatprep.subr.mxu0 0.0
    %626 = vmatpush1.msra.mxu0 0.0
    %627 = vmatprep.subr.mxu0 0.0
    %628 = vmatpush1.msra.mxu0 0.0
    %629 = vmatprep.subr.mxu0 0.0
    %630 = vmatpush1.msra.mxu0 0.0
    %631 = vmatprep.subr.mxu0 0.0
    %632 = vmatpush1.msra.mxu0 0.0
    %633 = vmatprep.subr.mxu0 0.0
    %634 = vmatpush1.msra.mxu0 0.0
    %635 = vmatprep.subr.mxu0 0.0
    %636 = vmatpush1.msra.mxu0 0.0
    %637 = vmatprep.subr.mxu0 0.0
    %638 = vmatpush1.msra.mxu0 0.0
    %639 = vmatprep.subr.mxu0 0.0
    %640 = vmatpush1.msra.mxu0 0.0
    %641 = vmatprep.subr.mxu0 0.0
    %642 = vmatpush1.msra.mxu0 0.0
    %643 = vmatprep.subr.mxu0 0.0
    %644 = vmatpush1.msra.mxu0 0.0
    %645 = vmatprep.subr.mxu0 0.0
    %646 = vmatpush1.msra.mxu0 %v22
    %647 = vmatprep.subr.mxu0 0.0
    %648 = vmatpush2.msra.mxu0 0.0
    %649 = vmatprep.subr.mxu0 0.0
    %650 = vmatpush2.msra.mxu0 0.0
    %651 = vmatprep.subr.mxu0 0.0
    %652 = vmatpush2.msra.mxu0 0.0
    %653 = vmatprep.subr.mxu0 0.0
    %654 = vmatpush2.msra.mxu0 0.0
    %655 = vmatprep.subr.mxu0 0.0
    %656 = vmatpush2.msra.mxu0 0.0
    %657 = vmatprep.subr.mxu0 0.0
    %658 = vmatpush2.msra.mxu0 0.0
    %659 = vmatprep.subr.mxu0 0.0
    %660 = vmatpush2.msra.mxu0 0.0
    %661 = vmatprep.subr.mxu0 0.0
    %662 = vmatpush2.msra.mxu0 0.0
    %663 = vmatprep.subr.mxu0 0.0
    %664 = vmatpush2.msra.mxu0 0.0
    %665 = vmatprep.subr.mxu0 0.0
    %666 = vmatpush2.msra.mxu0 0.0
    %667 = vmatprep.subr.mxu0 0.0
    %668 = vmatpush2.msra.mxu0 0.0
    %669 = vmatprep.subr.mxu0 0.0
    %670 = vmatpush2.msra.mxu0 0.0
    %671 = vmatprep.subr.mxu0 0.0
    %672 = vmatpush2.msra.mxu0 0.0
    %673 = vmatprep.subr.mxu0 0.0
    %674 = vmatpush2.msra.mxu0 0.0
    %675 = vmatprep.subr.mxu0 0.0
    %676 = vmatpush2.msra.mxu0 0.0
    %677 = vmatprep.subr.mxu0 0.0
    %678 = vmatpush2.msra.mxu0 0.0
    %679 = vmatprep.mubr.f32.mxu0 0.0
    %680 = vmatmul.mubr.f32.gmra.mxu0 %v613
    %v681 = vpop.f32.mrf.mxu0
    %v682 = vadd.f32 0.0, %v681
    %v683 = vpop.f32.mrf.mxu0
    %684 = vdwg.mxu0
    %693 = vrot.lane.b32.xlu0 %v171, 16
    %v694 = vpop.permute.xlu0 %693
    %695 = vrot.lane.b32.xlu0 %v244, 16
    %v696 = vpop.permute.xlu0 %695
    %697 = vrot.lane.b32.xlu0 %v317, 16
    %v698 = vpop.permute.xlu0 %697
    %699 = vrot.lane.b32.xlu0 %v390, 16
    %v700 = vpop.permute.xlu0 %699
    %701 = vrot.lane.b32.xlu0 %v463, 16
    %v702 = vpop.permute.xlu0 %701
    %703 = vrot.lane.b32.xlu0 %v536, 16
    %v704 = vpop.permute.xlu0 %703
    %705 = vrot.lane.b32.xlu0 %v609, 16
    %v706 = vpop.permute.xlu0 %705
    %707 = vrot.lane.b32.xlu0 %v682, 16
    %v708 = vpop.permute.xlu0 %707
    %vm717 = vcmask 130048
    %v718 = vsel %vm717, %v15, %v694
    %v719 = vsel %vm717, %v16, %v696
    %v720 = vsel %vm717, %v17, %v698
    %v721 = vsel %vm717, %v18, %v700
    %v722 = vsel %vm717, %v19, %v702
    %v723 = vsel %vm717, %v20, %v704
    %v724 = vsel %vm717, %v21, %v706
    %v725 = vsel %vm717, %v22, %v708
    %v726 = vld [vmem:[%s2] sm:$0xff]
    %v727 = vld [vmem:[%s2 + $0x8] sm:$0xff]
    %v728 = vld [vmem:[%s2 + $0x10] sm:$0xff]
    %v729 = vld [vmem:[%s2 + $0x18] sm:$0xff]
    %vm730 = vcmask 261120
    %v732 = vsel %vm730, %v718, 0
    %v735 = vsel %vm730, %v719, 0
    %v738 = vsel %vm730, %v720, 0
    %v741 = vsel %vm730, %v721, 0
    %v744 = vsel %vm730, %v722, 0
    %v747 = vsel %vm730, %v723, 0
    %v750 = vsel %vm730, %v724, 0
    %v753 = vsel %vm730, %v725, 0
    %755 = vmatprep.subr.mxu0 0.0
    %756 = vmatpush1.msra.mxu0 0.0
    %757 = vmatprep.subr.mxu0 0.0
    %758 = vmatpush1.msra.mxu0 0.0
    %759 = vmatprep.subr.mxu0 0.0
    %760 = vmatpush1.msra.mxu0 0.0
    %761 = vmatprep.subr.mxu0 0.0
    %762 = vmatpush1.msra.mxu0 0.0
    %763 = vmatprep.subr.mxu0 0.0
    %764 = vmatpush1.msra.mxu0 0.0
    %765 = vmatprep.subr.mxu0 0.0
    %766 = vmatpush1.msra.mxu0 0.0
    %767 = vmatprep.subr.mxu0 0.0
    %768 = vmatpush1.msra.mxu0 0.0
    %769 = vmatprep.subr.mxu0 0.0
    %770 = vmatpush1.msra.mxu0 0.0
    %771 = vmatprep.subr.mxu0 0.0
    %772 = vmatpush1.msra.mxu0 0.0
    %773 = vmatprep.subr.mxu0 0.0
    %774 = vmatpush1.msra.mxu0 0.0
    %775 = vmatprep.subr.mxu0 0.0
    %776 = vmatpush1.msra.mxu0 0.0
    %777 = vmatprep.subr.mxu0 0.0
    %778 = vmatpush1.msra.mxu0 0.0
    %779 = vmatprep.subr.mxu0 0.0
    %780 = vmatpush1.msra.mxu0 %v729
    %781 = vmatprep.subr.mxu0 0.0
    %782 = vmatpush1.msra.mxu0 %v728
    %783 = vmatprep.subr.mxu0 0.0
    %784 = vmatpush1.msra.mxu0 %v727
    %785 = vmatprep.subr.mxu0 0.0
    %786 = vmatpush1.msra.mxu0 %v726
    %787 = vmatprep.subr.mxu0 0.0
    %788 = vmatpush2.msra.mxu0 0.0
    %789 = vmatprep.subr.mxu0 0.0
    %790 = vmatpush2.msra.mxu0 0.0
    %791 = vmatprep.subr.mxu0 0.0
    %792 = vmatpush2.msra.mxu0 0.0
    %793 = vmatprep.subr.mxu0 0.0
    %794 = vmatpush2.msra.mxu0 0.0
    %795 = vmatprep.subr.mxu0 0.0
    %796 = vmatpush2.msra.mxu0 0.0
    %797 = vmatprep.subr.mxu0 0.0
    %798 = vmatpush2.msra.mxu0 0.0
    %799 = vmatprep.subr.mxu0 0.0
    %800 = vmatpush2.msra.mxu0 0.0
    %801 = vmatprep.subr.mxu0 0.0
    %802 = vmatpush2.msra.mxu0 0.0
    %803 = vmatprep.subr.mxu0 0.0
    %804 = vmatpush2.msra.mxu0 0.0
    %805 = vmatprep.subr.mxu0 0.0
    %806 = vmatpush2.msra.mxu0 0.0
    %807 = vmatprep.subr.mxu0 0.0
    %808 = vmatpush2.msra.mxu0 0.0
    %809 = vmatprep.subr.mxu0 0.0
    %810 = vmatpush2.msra.mxu0 0.0
    %811 = vmatprep.subr.mxu0 0.0
    %812 = vmatpush2.msra.mxu0 0.0
    %813 = vmatprep.subr.mxu0 0.0
    %814 = vmatpush2.msra.mxu0 0.0
    %815 = vmatprep.subr.mxu0 0.0
    %816 = vmatpush2.msra.mxu0 0.0
    %817 = vmatprep.subr.mxu0 0.0
    %818 = vmatpush2.msra.mxu0 0.0
    %819 = vmatprep.mubr.f32.mxu0 0.0
    %820 = vmatmul.mubr.f32.gmra.mxu0 %v732
    %v821 = vpop.f32.mrf.mxu0
    %v822 = vadd.f32 0.0, %v821
    %v823 = vpop.f32.mrf.mxu0
    %824 = vmatprep.mubr.f32.mxu0 0.0
    %825 = vmatmul.mubr.f32.gmra.mxu0 %v735
    %v826 = vpop.f32.mrf.mxu0
    %v827 = vadd.f32 0.0, %v826
    %v828 = vpop.f32.mrf.mxu0
    %829 = vmatprep.mubr.f32.mxu0 0.0
    %830 = vmatmul.mubr.f32.gmra.mxu0 %v738
    %v831 = vpop.f32.mrf.mxu0
    %v832 = vadd.f32 0.0, %v831
    %v833 = vpop.f32.mrf.mxu0
    %834 = vmatprep.mubr.f32.mxu0 0.0
    %835 = vmatmul.mubr.f32.gmra.mxu0 %v741
    %v836 = vpop.f32.mrf.mxu0
    %v837 = vadd.f32 0.0, %v836
    %v838 = vpop.f32.mrf.mxu0
    %839 = vmatprep.mubr.f32.mxu0 0.0
    %840 = vmatmul.mubr.f32.gmra.mxu0 %v744
    %v841 = vpop.f32.mrf.mxu0
    %v842 = vadd.f32 0.0, %v841
    %v843 = vpop.f32.mrf.mxu0
    %844 = vmatprep.mubr.f32.mxu0 0.0
    %845 = vmatmul.mubr.f32.gmra.mxu0 %v747
    %v846 = vpop.f32.mrf.mxu0
    %v847 = vadd.f32 0.0, %v846
    %v848 = vpop.f32.mrf.mxu0
    %849 = vmatprep.mubr.f32.mxu0 0.0
    %850 = vmatmul.mubr.f32.gmra.mxu0 %v750
    %v851 = vpop.f32.mrf.mxu0
    %v852 = vadd.f32 0.0, %v851
    %v853 = vpop.f32.mrf.mxu0
    %854 = vmatprep.mubr.f32.mxu0 0.0
    %855 = vmatmul.mubr.f32.gmra.mxu0 %v753
    %v856 = vpop.f32.mrf.mxu0
    %v857 = vadd.f32 0.0, %v856
    %v858 = vpop.f32.mrf.mxu0
    %859 = vdwg.mxu0
    %v860 = vld [vmem:[%s2 + $0x20] sm:$0x1]
    %v861 = vld [vmem:[%s2 + $0x21] sm:$0x1]
    %vm862 = vcmask 523264
    %v863 = vsel %vm862, %v822, 0.0
    %v864 = vrot.slane %v863, 4
    %v865 = vadd.f32 %v863, %v864
    %v866 = vrot.slane %v865, 2
    %v867 = vadd.f32 %v865, %v866
    %v868 = vrot.slane %v867, 1
    %v869 = vadd.f32 %v867, %v868
    %v870 = vsel %vm862, %v827, 0.0
    %v871 = vrot.slane %v870, 4
    %v872 = vadd.f32 %v870, %v871
    %v873 = vrot.slane %v872, 2
    %v874 = vadd.f32 %v872, %v873
    %v875 = vrot.slane %v874, 1
    %v876 = vadd.f32 %v874, %v875
    %v877 = vsel %vm862, %v832, 0.0
    %v878 = vrot.slane %v877, 4
    %v879 = vadd.f32 %v877, %v878
    %v880 = vrot.slane %v879, 2
    %v881 = vadd.f32 %v879, %v880
    %v882 = vrot.slane %v881, 1
    %v883 = vadd.f32 %v881, %v882
    %v884 = vsel %vm862, %v837, 0.0
    %v885 = vrot.slane %v884, 4
    %v886 = vadd.f32 %v884, %v885
    %v887 = vrot.slane %v886, 2
    %v888 = vadd.f32 %v886, %v887
    %v889 = vrot.slane %v888, 1
    %v890 = vadd.f32 %v888, %v889
    %v891 = vsel %vm862, %v842, 0.0
    %v892 = vrot.slane %v891, 4
    %v893 = vadd.f32 %v891, %v892
    %v894 = vrot.slane %v893, 2
    %v895 = vadd.f32 %v893, %v894
    %v896 = vrot.slane %v895, 1
    %v897 = vadd.f32 %v895, %v896
    %v898 = vsel %vm862, %v847, 0.0
    %v899 = vrot.slane %v898, 4
    %v900 = vadd.f32 %v898, %v899
    %v901 = vrot.slane %v900, 2
    %v902 = vadd.f32 %v900, %v901
    %v903 = vrot.slane %v902, 1
    %v904 = vadd.f32 %v902, %v903
    %v905 = vsel %vm862, %v852, 0.0
    %v906 = vrot.slane %v905, 4
    %v907 = vadd.f32 %v905, %v906
    %v908 = vrot.slane %v907, 2
    %v909 = vadd.f32 %v907, %v908
    %v910 = vrot.slane %v909, 1
    %v911 = vadd.f32 %v909, %v910
    %v912 = vsel %vm862, %v857, 0.0
    %v913 = vrot.slane %v912, 4
    %v914 = vadd.f32 %v912, %v913
    %v915 = vrot.slane %v914, 2
    %v916 = vadd.f32 %v914, %v915
    %v917 = vrot.slane %v916, 1
    %v918 = vadd.f32 %v916, %v917
    %v919 = vrcp.pop 8.0
    %v920 = vmul.f32 %v869, %v919
    %v921 = vmul.f32 %v876, %v919
    %v922 = vmul.f32 %v883, %v919
    %v923 = vmul.f32 %v890, %v919
    %v924 = vmul.f32 %v897, %v919
    %v925 = vmul.f32 %v904, %v919
    %v926 = vmul.f32 %v911, %v919
    %v927 = vmul.f32 %v918, %v919
    %v928 = vsub.f32 %v822, %v920
    %v929 = vsub.f32 %v827, %v921
    %v930 = vsub.f32 %v832, %v922
    %v931 = vsub.f32 %v837, %v923
    %v932 = vsub.f32 %v842, %v924
    %v933 = vsub.f32 %v847, %v925
    %v934 = vsub.f32 %v852, %v926
    %v935 = vsub.f32 %v857, %v927
    %v936 = vmul.f32 %v928, %v928
    %v937 = vmul.f32 %v929, %v929
    %v938 = vmul.f32 %v930, %v930
    %v939 = vmul.f32 %v931, %v931
    %v940 = vmul.f32 %v932, %v932
    %v941 = vmul.f32 %v933, %v933
    %v942 = vmul.f32 %v934, %v934
    %v943 = vmul.f32 %v935, %v935
    %v944 = vsel %vm862, %v936, 0.0
    %v945 = vrot.slane %v944, 4
    %v946 = vadd.f32 %v944, %v945
    %v947 = vrot.slane %v946, 2
    %v948 = vadd.f32 %v946, %v947
    %v949 = vrot.slane %v948, 1
    %v950 = vadd.f32 %v948, %v949
    %v951 = vsel %vm862, %v937, 0.0
    %v952 = vrot.slane %v951, 4
    %v953 = vadd.f32 %v951, %v952
    %v954 = vrot.slane %v953, 2
    %v955 = vadd.f32 %v953, %v954
    %v956 = vrot.slane %v955, 1
    %v957 = vadd.f32 %v955, %v956
    %v958 = vsel %vm862, %v938, 0.0
    %v959 = vrot.slane %v958, 4
    %v960 = vadd.f32 %v958, %v959
    %v961 = vrot.slane %v960, 2
    %v962 = vadd.f32 %v960, %v961
    %v963 = vrot.slane %v962, 1
    %v964 = vadd.f32 %v962, %v963
    %v965 = vsel %vm862, %v939, 0.0
    %v966 = vrot.slane %v965, 4
    %v967 = vadd.f32 %v965, %v966
    %v968 = vrot.slane %v967, 2
    %v969 = vadd.f32 %v967, %v968
    %v970 = vrot.slane %v969, 1
    %v971 = vadd.f32 %v969, %v970
    %v972 = vsel %vm862, %v940, 0.0
    %v973 = vrot.slane %v972, 4
    %v974 = vadd.f32 %v972, %v973
    %v975 = vrot.slane %v974, 2
    %v976 = vadd.f32 %v974, %v975
    %v977 = vrot.slane %v976, 1
    %v978 = vadd.f32 %v976, %v977
    %v979 = vsel %vm862, %v941, 0.0
    %v980 = vrot.slane %v979, 4
    %v981 = vadd.f32 %v979, %v980
    %v982 = vrot.slane %v981, 2
    %v983 = vadd.f32 %v981, %v982
    %v984 = vrot.slane %v983, 1
    %v985 = vadd.f32 %v983, %v984
    %v986 = vsel %vm862, %v942, 0.0
    %v987 = vrot.slane %v986, 4
    %v988 = vadd.f32 %v986, %v987
    %v989 = vrot.slane %v988, 2
    %v990 = vadd.f32 %v988, %v989
    %v991 = vrot.slane %v990, 1
    %v992 = vadd.f32 %v990, %v991
    %v993 = vsel %vm862, %v943, 0.0
    %v994 = vrot.slane %v993, 4
    %v995 = vadd.f32 %v993, %v994
    %v996 = vrot.slane %v995, 2
    %v997 = vadd.f32 %v995, %v996
    %v998 = vrot.slane %v997, 1
    %v999 = vadd.f32 %v997, %v998
    %v1000 = vmul.f32 %v950, %v919
    %v1001 = vmul.f32 %v957, %v919
    %v1002 = vmul.f32 %v964, %v919
    %v1003 = vmul.f32 %v971, %v919
    %v1004 = vmul.f32 %v978, %v919
    %v1005 = vmul.f32 %v985, %v919
    %v1006 = vmul.f32 %v992, %v919
    %v1007 = vmul.f32 %v999, %v919
    %v1008 = vadd.f32 %v1000, 1e-05
    %v1009 = vadd.f32 %v1001, 1e-05
    %v1010 = vadd.f32 %v1002, 1e-05
    %v1011 = vadd.f32 %v1003, 1e-05
    %v1012 = vadd.f32 %v1004, 1e-05
    %v1013 = vadd.f32 %v1005, 1e-05
    %v1014 = vadd.f32 %v1006, 1e-05
    %v1015 = vadd.f32 %v1007, 1e-05
    %v1016 = vrsqrt.pop %v1008
    %v1017 = vrsqrt.pop %v1009
    %v1018 = vrsqrt.pop %v1010
    %v1019 = vrsqrt.pop %v1011
    %v1020 = vrsqrt.pop %v1012
    %v1021 = vrsqrt.pop %v1013
    %v1022 = vrsqrt.pop %v1014
    %v1023 = vrsqrt.pop %v1015
    %v1024 = vmul.f32 %v860, %v1016
    %v1025 = vmul.f32 %v860, %v1017
    %v1026 = vmul.f32 %v860, %v1018
    %v1027 = vmul.f32 %v860, %v1019
    %v1028 = vmul.f32 %v860, %v1020
    %v1029 = vmul.f32 %v860, %v1021
    %v1030 = vmul.f32 %v860, %v1022
    %v1031 = vmul.f32 %v860, %v1023
    %v1032 = vmul.f32 %v920, %v1024
    %v1033 = vmul.f32 %v921, %v1025
    %v1034 = vmul.f32 %v922, %v1026
    %v1035 = vmul.f32 %v923, %v1027
    %v1036 = vmul.f32 %v924, %v1028
    %v1037 = vmul.f32 %v925, %v1029
    %v1038 = vmul.f32 %v926, %v1030
    %v1039 = vmul.f32 %v927, %v1031
    %v1040 = vsub.f32 %v861, %v1032
    %v1041 = vsub.f32 %v861, %v1033
    %v1042 = vsub.f32 %v861, %v1034
    %v1043 = vsub.f32 %v861, %v1035
    %v1044 = vsub.f32 %v861, %v1036
    %v1045 = vsub.f32 %v861, %v1037
    %v1046 = vsub.f32 %v861, %v1038
    %v1047 = vsub.f32 %v861, %v1039
    %v1048 = vlaneseq
    %v1049 = vshrl.u32 %v1048, 7
    %v1050 = vsub.s32 0, %v1049
    %v1051 = vrot.slane %v1024, %v1050
    %v1052 = vlaneseq
    %v1053 = vshrl.u32 %v1052, 7
    %v1054 = vsub.s32 0, %v1053
    %v1055 = vrot.slane %v1025, %v1054
    %v1056 = vlaneseq
    %v1057 = vshrl.u32 %v1056, 7
    %v1058 = vsub.s32 0, %v1057
    %v1059 = vrot.slane %v1026, %v1058
    %v1060 = vlaneseq
    %v1061 = vshrl.u32 %v1060, 7
    %v1062 = vsub.s32 0, %v1061
    %v1063 = vrot.slane %v1027, %v1062
    %v1064 = vlaneseq
    %v1065 = vshrl.u32 %v1064, 7
    %v1066 = vsub.s32 0, %v1065
    %v1067 = vrot.slane %v1028, %v1066
    %v1068 = vlaneseq
    %v1069 = vshrl.u32 %v1068, 7
    %v1070 = vsub.s32 0, %v1069
    %v1071 = vrot.slane %v1029, %v1070
    %v1072 = vlaneseq
    %v1073 = vshrl.u32 %v1072, 7
    %v1074 = vsub.s32 0, %v1073
    %v1075 = vrot.slane %v1030, %v1074
    %v1076 = vlaneseq
    %v1077 = vshrl.u32 %v1076, 7
    %v1078 = vsub.s32 0, %v1077
    %v1079 = vrot.slane %v1031, %v1078
    %v1080 = vmul.f32 %v822, %v1051
    %v1081 = vmul.f32 %v827, %v1055
    %v1082 = vmul.f32 %v832, %v1059
    %v1083 = vmul.f32 %v837, %v1063
    %v1084 = vmul.f32 %v842, %v1067
    %v1085 = vmul.f32 %v847, %v1071
    %v1086 = vmul.f32 %v852, %v1075
    %v1087 = vmul.f32 %v857, %v1079
    %v1088 = vlaneseq
    %v1089 = vshrl.u32 %v1088, 7
    %v1090 = vsub.s32 0, %v1089
    %v1091 = vrot.slane %v1040, %v1090
    %v1092 = vlaneseq
    %v1093 = vshrl.u32 %v1092, 7
    %v1094 = vsub.s32 0, %v1093
    %v1095 = vrot.slane %v1041, %v1094
    %v1096 = vlaneseq
    %v1097 = vshrl.u32 %v1096, 7
    %v1098 = vsub.s32 0, %v1097
    %v1099 = vrot.slane %v1042, %v1098
    %v1100 = vlaneseq
    %v1101 = vshrl.u32 %v1100, 7
    %v1102 = vsub.s32 0, %v1101
    %v1103 = vrot.slane %v1043, %v1102
    %v1104 = vlaneseq
    %v1105 = vshrl.u32 %v1104, 7
    %v1106 = vsub.s32 0, %v1105
    %v1107 = vrot.slane %v1044, %v1106
    %v1108 = vlaneseq
    %v1109 = vshrl.u32 %v1108, 7
    %v1110 = vsub.s32 0, %v1109
    %v1111 = vrot.slane %v1045, %v1110
    %v1112 = vlaneseq
    %v1113 = vshrl.u32 %v1112, 7
    %v1114 = vsub.s32 0, %v1113
    %v1115 = vrot.slane %v1046, %v1114
    %v1116 = vlaneseq
    %v1117 = vshrl.u32 %v1116, 7
    %v1118 = vsub.s32 0, %v1117
    %v1119 = vrot.slane %v1047, %v1118
    %v1120 = vadd.f32 %v1080, %v1091
    %v1121 = vadd.f32 %v1081, %v1095
    %v1122 = vadd.f32 %v1082, %v1099
    %v1123 = vadd.f32 %v1083, %v1103
    %v1124 = vadd.f32 %v1084, %v1107
    %v1125 = vadd.f32 %v1085, %v1111
    %v1126 = vadd.f32 %v1086, %v1115
    %v1127 = vadd.f32 %v1087, %v1119
    %vm1128 = vcmp.ge.f32.partialorder %v1120, 0.0
    %vm1129 = vcmp.ge.f32.partialorder %v1121, 0.0
    %vm1130 = vcmp.ge.f32.partialorder %v1122, 0.0
    %vm1131 = vcmp.ge.f32.partialorder %v1123, 0.0
    %vm1132 = vcmp.ge.f32.partialorder %v1124, 0.0
    %vm1133 = vcmp.ge.f32.partialorder %v1125, 0.0
    %vm1134 = vcmp.ge.f32.partialorder %v1126, 0.0
    %vm1135 = vcmp.ge.f32.partialorder %v1127, 0.0
    %v1136 = vmul.f32 %v1120, 0.01
    %v1137 = vmul.f32 %v1121, 0.01
    %v1138 = vmul.f32 %v1122, 0.01
    %v1139 = vmul.f32 %v1123, 0.01
    %v1140 = vmul.f32 %v1124, 0.01
    %v1141 = vmul.f32 %v1125, 0.01
    %v1142 = vmul.f32 %v1126, 0.01
    %v1143 = vmul.f32 %v1127, 0.01
    %v1144 = vsel %vm1128, %v1120, %v1136
    %v1145 = vsel %vm1129, %v1121, %v1137
    %v1146 = vsel %vm1130, %v1122, %v1138
    %v1147 = vsel %vm1131, %v1123, %v1139
    %v1148 = vsel %vm1132, %v1124, %v1140
    %v1149 = vsel %vm1133, %v1125, %v1141
    %v1150 = vsel %vm1134, %v1126, %v1142
    %v1151 = vsel %vm1135, %v1127, %v1143
    %v1152 = vld [vmem:[%s2 + $0x28] sm:$0xff]
    %v1153 = vld [vmem:[%s2 + $0x30] sm:$0xff]
    %v1154 = vld [vmem:[%s2 + $0x38] sm:$0xff]
    %v1155 = vld [vmem:[%s2 + $0x40] sm:$0xff]
    %v1156 = vld [vmem:[%s2 + $0x48] sm:$0xff]
    %v1157 = vld [vmem:[%s2 + $0x50] sm:$0xff]
    %v1158 = vld [vmem:[%s2 + $0x58] sm:$0xff]
    %v1159 = vld [vmem:[%s2 + $0x60] sm:$0xff]
    %v1161 = vsel %vm862, %v1144, 0
    %v1164 = vsel %vm862, %v1145, 0
    %v1167 = vsel %vm862, %v1146, 0
    %v1170 = vsel %vm862, %v1147, 0
    %v1173 = vsel %vm862, %v1148, 0
    %v1176 = vsel %vm862, %v1149, 0
    %v1179 = vsel %vm862, %v1150, 0
    %v1182 = vsel %vm862, %v1151, 0
    %1184 = vmatprep.subr.mxu0 0.0
    %1185 = vmatpush1.msra.mxu0 0.0
    %1186 = vmatprep.subr.mxu0 0.0
    %1187 = vmatpush1.msra.mxu0 0.0
    %1188 = vmatprep.subr.mxu0 0.0
    %1189 = vmatpush1.msra.mxu0 0.0
    %1190 = vmatprep.subr.mxu0 0.0
    %1191 = vmatpush1.msra.mxu0 0.0
    %1192 = vmatprep.subr.mxu0 0.0
    %1193 = vmatpush1.msra.mxu0 0.0
    %1194 = vmatprep.subr.mxu0 0.0
    %1195 = vmatpush1.msra.mxu0 0.0
    %1196 = vmatprep.subr.mxu0 0.0
    %1197 = vmatpush1.msra.mxu0 0.0
    %1198 = vmatprep.subr.mxu0 0.0
    %1199 = vmatpush1.msra.mxu0 0.0
    %1200 = vmatprep.subr.mxu0 0.0
    %1201 = vmatpush1.msra.mxu0 %v1159
    %1202 = vmatprep.subr.mxu0 0.0
    %1203 = vmatpush1.msra.mxu0 %v1158
    %1204 = vmatprep.subr.mxu0 0.0
    %1205 = vmatpush1.msra.mxu0 %v1157
    %1206 = vmatprep.subr.mxu0 0.0
    %1207 = vmatpush1.msra.mxu0 %v1156
    %1208 = vmatprep.subr.mxu0 0.0
    %1209 = vmatpush1.msra.mxu0 %v1155
    %1210 = vmatprep.subr.mxu0 0.0
    %1211 = vmatpush1.msra.mxu0 %v1154
    %1212 = vmatprep.subr.mxu0 0.0
    %1213 = vmatpush1.msra.mxu0 %v1153
    %1214 = vmatprep.subr.mxu0 0.0
    %1215 = vmatpush1.msra.mxu0 %v1152
    %1216 = vmatprep.subr.mxu0 0.0
    %1217 = vmatpush2.msra.mxu0 0.0
    %1218 = vmatprep.subr.mxu0 0.0
    %1219 = vmatpush2.msra.mxu0 0.0
    %1220 = vmatprep.subr.mxu0 0.0
    %1221 = vmatpush2.msra.mxu0 0.0
    %1222 = vmatprep.subr.mxu0 0.0
    %1223 = vmatpush2.msra.mxu0 0.0
    %1224 = vmatprep.subr.mxu0 0.0
    %1225 = vmatpush2.msra.mxu0 0.0
    %1226 = vmatprep.subr.mxu0 0.0
    %1227 = vmatpush2.msra.mxu0 0.0
    %1228 = vmatprep.subr.mxu0 0.0
    %1229 = vmatpush2.msra.mxu0 0.0
    %1230 = vmatprep.subr.mxu0 0.0
    %1231 = vmatpush2.msra.mxu0 0.0
    %1232 = vmatprep.subr.mxu0 0.0
    %1233 = vmatpush2.msra.mxu0 0.0
    %1234 = vmatprep.subr.mxu0 0.0
    %1235 = vmatpush2.msra.mxu0 0.0
    %1236 = vmatprep.subr.mxu0 0.0
    %1237 = vmatpush2.msra.mxu0 0.0
    %1238 = vmatprep.subr.mxu0 0.0
    %1239 = vmatpush2.msra.mxu0 0.0
    %1240 = vmatprep.subr.mxu0 0.0
    %1241 = vmatpush2.msra.mxu0 0.0
    %1242 = vmatprep.subr.mxu0 0.0
    %1243 = vmatpush2.msra.mxu0 0.0
    %1244 = vmatprep.subr.mxu0 0.0
    %1245 = vmatpush2.msra.mxu0 0.0
    %1246 = vmatprep.subr.mxu0 0.0
    %1247 = vmatpush2.msra.mxu0 0.0
    %1248 = vmatprep.mubr.f32.mxu0 0.0
    %1249 = vmatmul.mubr.f32.gmra.mxu0 %v1161
    %v1250 = vpop.f32.mrf.mxu0
    %v1251 = vadd.f32 0.0, %v1250
    %v1252 = vpop.f32.mrf.mxu0
    %1253 = vmatprep.mubr.f32.mxu0 0.0
    %1254 = vmatmul.mubr.f32.gmra.mxu0 %v1164
    %v1255 = vpop.f32.mrf.mxu0
    %v1256 = vadd.f32 0.0, %v1255
    %v1257 = vpop.f32.mrf.mxu0
    %1258 = vmatprep.mubr.f32.mxu0 0.0
    %1259 = vmatmul.mubr.f32.gmra.mxu0 %v1167
    %v1260 = vpop.f32.mrf.mxu0
    %v1261 = vadd.f32 0.0, %v1260
    %v1262 = vpop.f32.mrf.mxu0
    %1263 = vmatprep.mubr.f32.mxu0 0.0
    %1264 = vmatmul.mubr.f32.gmra.mxu0 %v1170
    %v1265 = vpop.f32.mrf.mxu0
    %v1266 = vadd.f32 0.0, %v1265
    %v1267 = vpop.f32.mrf.mxu0
    %1268 = vmatprep.mubr.f32.mxu0 0.0
    %1269 = vmatmul.mubr.f32.gmra.mxu0 %v1173
    %v1270 = vpop.f32.mrf.mxu0
    %v1271 = vadd.f32 0.0, %v1270
    %v1272 = vpop.f32.mrf.mxu0
    %1273 = vmatprep.mubr.f32.mxu0 0.0
    %1274 = vmatmul.mubr.f32.gmra.mxu0 %v1176
    %v1275 = vpop.f32.mrf.mxu0
    %v1276 = vadd.f32 0.0, %v1275
    %v1277 = vpop.f32.mrf.mxu0
    %1278 = vmatprep.mubr.f32.mxu0 0.0
    %1279 = vmatmul.mubr.f32.gmra.mxu0 %v1179
    %v1280 = vpop.f32.mrf.mxu0
    %v1281 = vadd.f32 0.0, %v1280
    %v1282 = vpop.f32.mrf.mxu0
    %1283 = vmatprep.mubr.f32.mxu0 0.0
    %1284 = vmatmul.mubr.f32.gmra.mxu0 %v1182
    %v1285 = vpop.f32.mrf.mxu0
    %v1286 = vadd.f32 0.0, %v1285
    %v1287 = vpop.f32.mrf.mxu0
    %1288 = vdwg.mxu0
    %v1289 = vld [vmem:[%s2 + $0x68] sm:$0x1]
    %v1290 = vld [vmem:[%s2 + $0x69] sm:$0x1]
    %v1291 = vsel %vm730, %v1251, 0.0
    %v1292 = vrot.slane %v1291, 4
    %v1293 = vadd.f32 %v1291, %v1292
    %v1294 = vrot.slane %v1293, 2
    %v1295 = vadd.f32 %v1293, %v1294
    %v1296 = vrot.slane %v1295, 1
    %v1297 = vadd.f32 %v1295, %v1296
    %v1298 = vsel %vm730, %v1256, 0.0
    %v1299 = vrot.slane %v1298, 4
    %v1300 = vadd.f32 %v1298, %v1299
    %v1301 = vrot.slane %v1300, 2
    %v1302 = vadd.f32 %v1300, %v1301
    %v1303 = vrot.slane %v1302, 1
    %v1304 = vadd.f32 %v1302, %v1303
    %v1305 = vsel %vm730, %v1261, 0.0
    %v1306 = vrot.slane %v1305, 4
    %v1307 = vadd.f32 %v1305, %v1306
    %v1308 = vrot.slane %v1307, 2
    %v1309 = vadd.f32 %v1307, %v1308
    %v1310 = vrot.slane %v1309, 1
    %v1311 = vadd.f32 %v1309, %v1310
    %v1312 = vsel %vm730, %v1266, 0.0
    %v1313 = vrot.slane %v1312, 4
    %v1314 = vadd.f32 %v1312, %v1313
    %v1315 = vrot.slane %v1314, 2
    %v1316 = vadd.f32 %v1314, %v1315
    %v1317 = vrot.slane %v1316, 1
    %v1318 = vadd.f32 %v1316, %v1317
    %v1319 = vsel %vm730, %v1271, 0.0
    %v1320 = vrot.slane %v1319, 4
    %v1321 = vadd.f32 %v1319, %v1320
    %v1322 = vrot.slane %v1321, 2
    %v1323 = vadd.f32 %v1321, %v1322
    %v1324 = vrot.slane %v1323, 1
    %v1325 = vadd.f32 %v1323, %v1324
    %v1326 = vsel %vm730, %v1276, 0.0
    %v1327 = vrot.slane %v1326, 4
    %v1328 = vadd.f32 %v1326, %v1327
    %v1329 = vrot.slane %v1328, 2
    %v1330 = vadd.f32 %v1328, %v1329
    %v1331 = vrot.slane %v1330, 1
    %v1332 = vadd.f32 %v1330, %v1331
    %v1333 = vsel %vm730, %v1281, 0.0
    %v1334 = vrot.slane %v1333, 4
    %v1335 = vadd.f32 %v1333, %v1334
    %v1336 = vrot.slane %v1335, 2
    %v1337 = vadd.f32 %v1335, %v1336
    %v1338 = vrot.slane %v1337, 1
    %v1339 = vadd.f32 %v1337, %v1338
    %v1340 = vsel %vm730, %v1286, 0.0
    %v1341 = vrot.slane %v1340, 4
    %v1342 = vadd.f32 %v1340, %v1341
    %v1343 = vrot.slane %v1342, 2
    %v1344 = vadd.f32 %v1342, %v1343
    %v1345 = vrot.slane %v1344, 1
    %v1346 = vadd.f32 %v1344, %v1345
    %v1347 = vmul.f32 %v1297, %v919
    %v1348 = vmul.f32 %v1304, %v919
    %v1349 = vmul.f32 %v1311, %v919
    %v1350 = vmul.f32 %v1318, %v919
    %v1351 = vmul.f32 %v1325, %v919
    %v1352 = vmul.f32 %v1332, %v919
    %v1353 = vmul.f32 %v1339, %v919
    %v1354 = vmul.f32 %v1346, %v919
    %v1355 = vsub.f32 %v1251, %v1347
    %v1356 = vsub.f32 %v1256, %v1348
    %v1357 = vsub.f32 %v1261, %v1349
    %v1358 = vsub.f32 %v1266, %v1350
    %v1359 = vsub.f32 %v1271, %v1351
    %v1360 = vsub.f32 %v1276, %v1352
    %v1361 = vsub.f32 %v1281, %v1353
    %v1362 = vsub.f32 %v1286, %v1354
    %v1363 = vmul.f32 %v1355, %v1355
    %v1364 = vmul.f32 %v1356, %v1356
    %v1365 = vmul.f32 %v1357, %v1357
    %v1366 = vmul.f32 %v1358, %v1358
    %v1367 = vmul.f32 %v1359, %v1359
    %v1368 = vmul.f32 %v1360, %v1360
    %v1369 = vmul.f32 %v1361, %v1361
    %v1370 = vmul.f32 %v1362, %v1362
    %v1371 = vsel %vm730, %v1363, 0.0
    %v1372 = vrot.slane %v1371, 4
    %v1373 = vadd.f32 %v1371, %v1372
    %v1374 = vrot.slane %v1373, 2
    %v1375 = vadd.f32 %v1373, %v1374
    %v1376 = vrot.slane %v1375, 1
    %v1377 = vadd.f32 %v1375, %v1376
    %v1378 = vsel %vm730, %v1364, 0.0
    %v1379 = vrot.slane %v1378, 4
    %v1380 = vadd.f32 %v1378, %v1379
    %v1381 = vrot.slane %v1380, 2
    %v1382 = vadd.f32 %v1380, %v1381
    %v1383 = vrot.slane %v1382, 1
    %v1384 = vadd.f32 %v1382, %v1383
    %v1385 = vsel %vm730, %v1365, 0.0
    %v1386 = vrot.slane %v1385, 4
    %v1387 = vadd.f32 %v1385, %v1386
    %v1388 = vrot.slane %v1387, 2
    %v1389 = vadd.f32 %v1387, %v1388
    %v1390 = vrot.slane %v1389, 1
    %v1391 = vadd.f32 %v1389, %v1390
    %v1392 = vsel %vm730, %v1366, 0.0
    %v1393 = vrot.slane %v1392, 4
    %v1394 = vadd.f32 %v1392, %v1393
    %v1395 = vrot.slane %v1394, 2
    %v1396 = vadd.f32 %v1394, %v1395
    %v1397 = vrot.slane %v1396, 1
    %v1398 = vadd.f32 %v1396, %v1397
    %v1399 = vsel %vm730, %v1367, 0.0
    %v1400 = vrot.slane %v1399, 4
    %v1401 = vadd.f32 %v1399, %v1400
    %v1402 = vrot.slane %v1401, 2
    %v1403 = vadd.f32 %v1401, %v1402
    %v1404 = vrot.slane %v1403, 1
    %v1405 = vadd.f32 %v1403, %v1404
    %v1406 = vsel %vm730, %v1368, 0.0
    %v1407 = vrot.slane %v1406, 4
    %v1408 = vadd.f32 %v1406, %v1407
    %v1409 = vrot.slane %v1408, 2
    %v1410 = vadd.f32 %v1408, %v1409
    %v1411 = vrot.slane %v1410, 1
    %v1412 = vadd.f32 %v1410, %v1411
    %v1413 = vsel %vm730, %v1369, 0.0
    %v1414 = vrot.slane %v1413, 4
    %v1415 = vadd.f32 %v1413, %v1414
    %v1416 = vrot.slane %v1415, 2
    %v1417 = vadd.f32 %v1415, %v1416
    %v1418 = vrot.slane %v1417, 1
    %v1419 = vadd.f32 %v1417, %v1418
    %v1420 = vsel %vm730, %v1370, 0.0
    %v1421 = vrot.slane %v1420, 4
    %v1422 = vadd.f32 %v1420, %v1421
    %v1423 = vrot.slane %v1422, 2
    %v1424 = vadd.f32 %v1422, %v1423
    %v1425 = vrot.slane %v1424, 1
    %v1426 = vadd.f32 %v1424, %v1425
    %v1427 = vmul.f32 %v1377, %v919
    %v1428 = vmul.f32 %v1384, %v919
    %v1429 = vmul.f32 %v1391, %v919
    %v1430 = vmul.f32 %v1398, %v919
    %v1431 = vmul.f32 %v1405, %v919
    %v1432 = vmul.f32 %v1412, %v919
    %v1433 = vmul.f32 %v1419, %v919
    %v1434 = vmul.f32 %v1426, %v919
    %v1435 = vadd.f32 %v1427, 1e-05
    %v1436 = vadd.f32 %v1428, 1e-05
    %v1437 = vadd.f32 %v1429, 1e-05
    %v1438 = vadd.f32 %v1430, 1e-05
    %v1439 = vadd.f32 %v1431, 1e-05
    %v1440 = vadd.f32 %v1432, 1e-05
    %v1441 = vadd.f32 %v1433, 1e-05
    %v1442 = vadd.f32 %v1434, 1e-05
    %v1443 = vrsqrt.pop %v1435
    %v1444 = vrsqrt.pop %v1436
    %v1445 = vrsqrt.pop %v1437
    %v1446 = vrsqrt.pop %v1438
    %v1447 = vrsqrt.pop %v1439
    %v1448 = vrsqrt.pop %v1440
    %v1449 = vrsqrt.pop %v1441
    %v1450 = vrsqrt.pop %v1442
    %v1451 = vmul.f32 %v1289, %v1443
    %v1452 = vmul.f32 %v1289, %v1444
    %v1453 = vmul.f32 %v1289, %v1445
    %v1454 = vmul.f32 %v1289, %v1446
    %v1455 = vmul.f32 %v1289, %v1447
    %v1456 = vmul.f32 %v1289, %v1448
    %v1457 = vmul.f32 %v1289, %v1449
    %v1458 = vmul.f32 %v1289, %v1450
    %v1459 = vmul.f32 %v1347, %v1451
    %v1460 = vmul.f32 %v1348, %v1452
    %v1461 = vmul.f32 %v1349, %v1453
    %v1462 = vmul.f32 %v1350, %v1454
    %v1463 = vmul.f32 %v1351, %v1455
    %v1464 = vmul.f32 %v1352, %v1456
    %v1465 = vmul.f32 %v1353, %v1457
    %v1466 = vmul.f32 %v1354, %v1458
    %v1467 = vsub.f32 %v1290, %v1459
    %v1468 = vsub.f32 %v1290, %v1460
    %v1469 = vsub.f32 %v1290, %v1461
    %v1470 = vsub.f32 %v1290, %v1462
    %v1471 = vsub.f32 %v1290, %v1463
    %v1472 = vsub.f32 %v1290, %v1464
    %v1473 = vsub.f32 %v1290, %v1465
    %v1474 = vsub.f32 %v1290, %v1466
    %v1475 = vlaneseq
    %v1476 = vshrl.u32 %v1475, 7
    %v1477 = vsub.s32 0, %v1476
    %v1478 = vrot.slane %v1451, %v1477
    %v1479 = vlaneseq
    %v1480 = vshrl.u32 %v1479, 7
    %v1481 = vsub.s32 0, %v1480
    %v1482 = vrot.slane %v1452, %v1481
    %v1483 = vlaneseq
    %v1484 = vshrl.u32 %v1483, 7
    %v1485 = vsub.s32 0, %v1484
    %v1486 = vrot.slane %v1453, %v1485
    %v1487 = vlaneseq
    %v1488 = vshrl.u32 %v1487, 7
    %v1489 = vsub.s32 0, %v1488
    %v1490 = vrot.slane %v1454, %v1489
    %v1491 = vlaneseq
    %v1492 = vshrl.u32 %v1491, 7
    %v1493 = vsub.s32 0, %v1492
    %v1494 = vrot.slane %v1455, %v1493
    %v1495 = vlaneseq
    %v1496 = vshrl.u32 %v1495, 7
    %v1497 = vsub.s32 0, %v1496
    %v1498 = vrot.slane %v1456, %v1497
    %v1499 = vlaneseq
    %v1500 = vshrl.u32 %v1499, 7
    %v1501 = vsub.s32 0, %v1500
    %v1502 = vrot.slane %v1457, %v1501
    %v1503 = vlaneseq
    %v1504 = vshrl.u32 %v1503, 7
    %v1505 = vsub.s32 0, %v1504
    %v1506 = vrot.slane %v1458, %v1505
    %v1507 = vmul.f32 %v1251, %v1478
    %v1508 = vmul.f32 %v1256, %v1482
    %v1509 = vmul.f32 %v1261, %v1486
    %v1510 = vmul.f32 %v1266, %v1490
    %v1511 = vmul.f32 %v1271, %v1494
    %v1512 = vmul.f32 %v1276, %v1498
    %v1513 = vmul.f32 %v1281, %v1502
    %v1514 = vmul.f32 %v1286, %v1506
    %v1515 = vlaneseq
    %v1516 = vshrl.u32 %v1515, 7
    %v1517 = vsub.s32 0, %v1516
    %v1518 = vrot.slane %v1467, %v1517
    %v1519 = vlaneseq
    %v1520 = vshrl.u32 %v1519, 7
    %v1521 = vsub.s32 0, %v1520
    %v1522 = vrot.slane %v1468, %v1521
    %v1523 = vlaneseq
    %v1524 = vshrl.u32 %v1523, 7
    %v1525 = vsub.s32 0, %v1524
    %v1526 = vrot.slane %v1469, %v1525
    %v1527 = vlaneseq
    %v1528 = vshrl.u32 %v1527, 7
    %v1529 = vsub.s32 0, %v1528
    %v1530 = vrot.slane %v1470, %v1529
    %v1531 = vlaneseq
    %v1532 = vshrl.u32 %v1531, 7
    %v1533 = vsub.s32 0, %v1532
    %v1534 = vrot.slane %v1471, %v1533
    %v1535 = vlaneseq
    %v1536 = vshrl.u32 %v1535, 7
    %v1537 = vsub.s32 0, %v1536
    %v1538 = vrot.slane %v1472, %v1537
    %v1539 = vlaneseq
    %v1540 = vshrl.u32 %v1539, 7
    %v1541 = vsub.s32 0, %v1540
    %v1542 = vrot.slane %v1473, %v1541
    %v1543 = vlaneseq
    %v1544 = vshrl.u32 %v1543, 7
    %v1545 = vsub.s32 0, %v1544
    %v1546 = vrot.slane %v1474, %v1545
    %v1547 = vadd.f32 %v1507, %v1518
    %v1548 = vadd.f32 %v1508, %v1522
    %v1549 = vadd.f32 %v1509, %v1526
    %v1550 = vadd.f32 %v1510, %v1530
    %v1551 = vadd.f32 %v1511, %v1534
    %v1552 = vadd.f32 %v1512, %v1538
    %v1553 = vadd.f32 %v1513, %v1542
    %v1554 = vadd.f32 %v1514, %v1546
    %1555 = vst.msk [vmem:[#allocation2] sm:$0xff] %vm730, %v1547
    %1556 = vst.msk [vmem:[#allocation2 + $0x8] sm:$0xff] %vm730, %v1548
    %1557 = vst.msk [vmem:[#allocation2 + $0x10] sm:$0xff] %vm730, %v1549
    %1558 = vst.msk [vmem:[#allocation2 + $0x18] sm:$0xff] %vm730, %v1550
    %1559 = vst.msk [vmem:[#allocation2 + $0x20] sm:$0xff] %vm730, %v1551
    %1560 = vst.msk [vmem:[#allocation2 + $0x28] sm:$0xff] %vm730, %v1552
    %1561 = vst.msk [vmem:[#allocation2 + $0x30] sm:$0xff] %vm730, %v1553
    %1562 = vst.msk [vmem:[#allocation2 + $0x38] sm:$0xff] %vm730, %v1554
    // Predicated region
    $region14: #{tpu_custom_call.1} parent=1 // pred_check
      _
    $region15: #{tpu_custom_call.1} parent=1 // pred_check_branch
      %1564 = sbr.rel (0) target = $region17
    $region16: #{tpu_custom_call.1} parent=1 // pred_region
      %s1566 = ssub.s32 1024, 1024
      %1567 = vsyncadd [#allocation3], %s1566
      %s1568 = sshll.u32 [#allocation2], 4
      %s1569 = int_to_ptr.vmem [resolvable:$true] %s1568
      %1574 = dma.vmem_to_hbm [thread:$0]  %s1569, 1024, %s3, [#allocation3], 128, 128, 8
    $region17: #{tpu_custom_call.1} parent=1 // pred_fallthru
      _
    // Predicated region
    $region18: #{tpu_custom_call.1} parent=1 // pred_check
      _
    $region19: #{tpu_custom_call.1} parent=1 // pred_check_branch
      %1576 = sbr.rel (0) target = $region21
    $region20: #{tpu_custom_call.1} parent=1 // pred_region
      %1577 = dma.done [#allocation3], 1024
    $region21: #{tpu_custom_call.1} parent=1 // pred_fallthru
      _
    %1578 = vsyncpa [#allocation3], 1

</llo_original>
